<compile_context>
chip_gen: v7x
topology: tpu7x:2x2x1
jax: 0.10.0
libtpu: 0.0.40
codegen_flags: <defaults>
</compile_context>

<pallas_src>
import functools
import math

import jax
import jax.numpy as jnp
import numpy as np
from jax import lax
from jax.experimental import pallas as pl
from jax.experimental.pallas import tpu as pltpu  # noqa: F401  (kept for memory-space/params use at scale)

# ---- model config (small, consistent with the module) ----
B, S, E, H, FF = 2, 8, 32, 4, 64
DH = E // H
LN_EPS = 1e-5
POSITION = True      # use ALiBi bias (kernel also handles position=False via a zero bias)
NEG_INF = -1e30      # large-negative mask value; exp() underflows to exactly 0, matching -inf softmax


def _layer_norm(x, gamma, beta):
    # x: (N, E); gamma/beta: (1, E). Biased variance, matching nn.LayerNorm. All f32.
    mu = jnp.mean(x, axis=-1, keepdims=True)
    xc = x - mu
    var = jnp.mean(xc * xc, axis=-1, keepdims=True)
    return xc * lax.rsqrt(var + LN_EPS) * gamma + beta


def decoder_layer_kernel(
    x_ref,        # (B*S, E)        f32
    wqkv_ref,     # (E, 3E)         bf16  [Wq|Wk|Wv], head-major columns, 1/sqrt(DH) folded into Wq
    bqkv_ref,     # (1, 3E)         f32
    wo_ref,       # (E, E)          bf16  fc_out weight (transposed)
    w1_ref,       # (E, FF)         bf16
    b1_ref,       # (1, FF)         f32
    w2_ref,       # (FF, E)         bf16
    vecs_ref,     # (6, E)          f32   rows: [b_out, ln1_g, ln1_b, b2, ln2_g, ln2_b]
    bias_ref,     # (H*B, S, S)     f32   ALiBi + causal mask, row n = h*B + b
    out_ref,      # (B*S, E + H*S)  f32   (or (B*S, E) when return_attn=False)
    *,
    return_attn: bool,
):
    f32 = jnp.float32
    bf16 = jnp.bfloat16

    x = x_ref[...]                                                            # (B*S, E) f32

    # Fused QKV projection: one bf16 MXU matmul, f32 accumulate.
    qkv = jnp.dot(x.astype(bf16), wqkv_ref[...], preferred_element_type=f32) + bqkv_ref[...]
    qkv_b = qkv.astype(bf16)                                                  # MXU-operand dtype only

    # Head-batched q/k/v: stack heads along the leading (batch) axis -> (H*B, S, DH), n = h*B + b.
    def head_stack(base):
        parts = [qkv_b[:, base + h * DH: base + (h + 1) * DH].reshape(B, S, DH) for h in range(H)]
        return jnp.concatenate(parts, axis=0)

    q = head_stack(0)        # scaled q (scale folded into Wq/bq host-side)
    k = head_stack(E)
    v = head_stack(2 * E)

    # Single batched QK^T for all heads; ALiBi + causal(-1e30) bias pre-expanded per (head, batch) row.
    scores = jnp.einsum("nqd,nkd->nqk", q, k, preferred_element_type=f32) + bias_ref[...]

    # Single fused softmax chain over all heads (reciprocal on the EUP slot). f32 statistics.
    m = jnp.max(scores, axis=-1, keepdims=True)
    p = jnp.exp(scores - m)
    aw = p * pl.reciprocal(jnp.sum(p, axis=-1, keepdims=True), approx=True)   # (H*B, S, S) f32

    # Single batched PV matmul for all heads.
    ctx = jnp.einsum("nqk,nkd->nqd", aw.astype(bf16), v, preferred_element_type=f32)   # (H*B, S, DH)

    # Regroup heads back to (B*S, E) head-major lanes (matches fc_out / PyTorch reshape layout).
    attn_cat = jnp.concatenate(
        [ctx[h * B:(h + 1) * B].reshape(B * S, DH) for h in range(H)], axis=-1)        # (B*S, E)

    # Single K=E output projection.
    attn = jnp.dot(attn_cat.astype(bf16), wo_ref[...], preferred_element_type=f32) + vecs_ref[0:1, :]

    # residual + LayerNorm 1 (dropout = identity in eval mode)
    y = _layer_norm(x + attn, vecs_ref[1:2, :], vecs_ref[2:3, :])

    # feed-forward: Linear -> ReLU -> Linear (bf16 MXU operands, f32 elementwise)
    h1 = jnp.maximum(jnp.dot(y.astype(bf16), w1_ref[...], preferred_element_type=f32) + b1_ref[...], 0.0)
    ffn = jnp.dot(h1.astype(bf16), w2_ref[...], preferred_element_type=f32) + vecs_ref[3:4, :]

    # residual + LayerNorm 2
    z = _layer_norm(y + ffn, vecs_ref[4:5, :], vecs_ref[5:6, :])              # (B*S, E)

    if return_attn:
        # aw2d[b*S + q, h*S + k] == attn_weights[b, h, q, k]
        aw_flat = jnp.concatenate(
            [aw[h * B:(h + 1) * B].reshape(B * S, S) for h in range(H)], axis=-1)      # (B*S, H*S)
        out_ref[...] = jnp.concatenate([z, aw_flat], axis=-1)     # ONE lane-concatenated store
    else:
        out_ref[...] = z


def transformer_decoder_layer(x, kernel_params, bias_stack, *, return_attn_weights=True):
    Bx, Sx, Ex = x.shape
    n_rows = Bx * Sx
    out_cols = Ex + (H * Sx if return_attn_weights else 0)
    kernel = functools.partial(decoder_layer_kernel, return_attn=return_attn_weights)
    # Grid-less single invocation: at (B*S, E) = (16, 32) the problem is latency/relayout bound and a
    # grid step (~0.35 us each) would cost more than the whole compute.
    # TODO(synk): at larger B*S add a row-block grid axis with dimension_semantics=("parallel",) so
    # v7x's second TensorCore is used, generate the ALiBi/causal bias in-kernel (iota) and tile the kv
    # axis instead of DMAing the O(S^2) bias, and set pltpu.CompilerParams(vmem_limit_bytes=...).
    slab = pl.pallas_call(
        kernel,
        out_shape=jax.ShapeDtypeStruct((n_rows, out_cols), jnp.float32),
    )(x.reshape(n_rows, Ex), *kernel_params, bias_stack)
    if not return_attn_weights:
        return slab.reshape(Bx, Sx, Ex), None
    out = slab[:, :Ex].reshape(Bx, Sx, Ex)
    attnw = slab[:, Ex:].reshape(Bx, Sx, H, Sx).transpose(0, 2, 1, 3)
    return out, attnw


# ---------------- parameter init (deterministic, PyTorch-layout) ----------------
def init_params(key):
    ks = jax.random.split(key, 8)
    p = {}
    p["w_qkv"] = 0.02 * jax.random.normal(ks[0], (3 * E, E), jnp.float32)   # (out, in)
    p["b_qkv"] = 0.02 * jax.random.normal(ks[1], (3 * E,), jnp.float32)
    p["w_out"] = 0.02 * jax.random.normal(ks[2], (E, E), jnp.float32)
    p["b_out"] = 0.02 * jax.random.normal(ks[3], (E,), jnp.float32)
    p["ln1_g"] = jnp.ones((E,), jnp.float32)
    p["ln1_b"] = jnp.zeros((E,), jnp.float32)
    p["w1"] = 0.02 * jax.random.normal(ks[4], (FF, E), jnp.float32)
    p["b1"] = 0.02 * jax.random.normal(ks[5], (FF,), jnp.float32)
    p["w2"] = 0.02 * jax.random.normal(ks[6], (E, FF), jnp.float32)
    p["b2"] = 0.02 * jax.random.normal(ks[7], (E,), jnp.float32)
    p["ln2_g"] = jnp.ones((E,), jnp.float32)
    p["ln2_b"] = jnp.zeros((E,), jnp.float32)
    return p


def to_kernel_params(p):
    # qkv_proj output column c = h*3*DH + j ; q: j<DH, k: DH<=j<2DH, v: j>=2DH (PyTorch chunk after reshape)
    scale = 1.0 / math.sqrt(DH)
    wt = p["w_qkv"].T.reshape(E, H, 3 * DH)            # (in, head, 3*dh)
    wq = wt[:, :, :DH].reshape(E, E) * scale           # fold 1/sqrt(DH) into Q weights
    wk = wt[:, :, DH:2 * DH].reshape(E, E)
    wv = wt[:, :, 2 * DH:].reshape(E, E)
    bt = p["b_qkv"].reshape(H, 3 * DH)
    bq = bt[:, :DH].reshape(1, E) * scale              # fold 1/sqrt(DH) into Q bias
    bk = bt[:, DH:2 * DH].reshape(1, E)
    bv = bt[:, 2 * DH:].reshape(1, E)
    w_qkv_fused = jnp.concatenate([wq, wk, wv], axis=1).astype(jnp.bfloat16)    # (E, 3E) bf16
    b_qkv_fused = jnp.concatenate([bq, bk, bv], axis=1)                         # (1, 3E) f32
    vecs = jnp.concatenate(
        [p["b_out"].reshape(1, E), p["ln1_g"].reshape(1, E), p["ln1_b"].reshape(1, E),
         p["b2"].reshape(1, E), p["ln2_g"].reshape(1, E), p["ln2_b"].reshape(1, E)],
        axis=0)                                                                 # (6, E) f32
    return [
        w_qkv_fused, b_qkv_fused,
        p["w_out"].T.astype(jnp.bfloat16),
        p["w1"].T.astype(jnp.bfloat16), p["b1"].reshape(1, FF),
        p["w2"].T.astype(jnp.bfloat16),
        vecs,
    ]


def alibi_slopes(num_heads):
    def pow2_slopes(n):
        start = 2 ** (-2 ** (-(math.log2(n) - 3)))
        return [start * (start ** i) for i in range(n)]
    if math.log2(num_heads).is_integer():
        slopes = pow2_slopes(num_heads)
    else:
        cp2 = 2 ** math.floor(math.log2(num_heads))
        slopes = pow2_slopes(cp2)
        slopes += slopes[-1:] * (num_heads - cp2)
    return jnp.asarray(slopes, jnp.float32)


def make_alibi_bias(seq_len, position):
    if not position:
        return jnp.zeros((H, seq_len, seq_len), jnp.float32)
    pos = jnp.arange(seq_len, dtype=jnp.float32)
    dist = pos[None, :] - pos[:, None]                  # [i, j] = j - i
    return alibi_slopes(H)[:, None, None] * dist[None]  # (H, S, S)


def make_masked_bias_stack(seq_len, batch, position):
    # ALiBi bias with the causal mask folded in (large-negative above the diagonal),
    # pre-expanded per (head, batch) leading row: stack[n = h*B + b] = masked_bias[h].
    alibi = make_alibi_bias(seq_len, position)
    causal = jnp.tril(jnp.ones((seq_len, seq_len), jnp.float32))
    masked = jnp.where(causal[None] == 0, NEG_INF, alibi).astype(jnp.float32)   # (H, S, S)
    return jnp.repeat(masked, batch, axis=0)                                    # (H*B, S, S)


# ---------------- pure-JAX reference (mirrors the PyTorch forward) ----------------
def reference_forward(x, p, alibi_bias):
    def ln(v, g, b):
        mu = jnp.mean(v, axis=-1, keepdims=True)
        var = jnp.mean((v - mu) ** 2, axis=-1, keepdims=True)
        return (v - mu) / jnp.sqrt(var + LN_EPS) * g + b

    qkv = x @ p["w_qkv"].T + p["b_qkv"]
    qkv = qkv.reshape(B, S, H, 3 * DH)
    q, k, v = qkv[..., :DH], qkv[..., DH:2 * DH], qkv[..., 2 * DH:]
    scores = jnp.einsum("bqhd,bkhd->bhqk", q, k, precision="highest") / math.sqrt(DH)
    scores = scores + alibi_bias[None]
    mask = jnp.tril(jnp.ones((S, S)))
    scores = jnp.where(mask == 0, -jnp.inf, scores)
    aw = jax.nn.softmax(scores, axis=-1)
    ao = jnp.einsum("bhqk,bkhd->bqhd", aw, v, precision="highest").reshape(B, S, E)
    attn = ao @ p["w_out"].T + p["b_out"]
    x1 = ln(x + attn, p["ln1_g"], p["ln1_b"])
    ff = jax.nn.relu(x1 @ p["w1"].T + p["b1"]) @ p["w2"].T + p["b2"]
    x2 = ln(x1 + ff, p["ln2_g"], p["ln2_b"])
    return x2, aw


if __name__ == "__main__":
    key = jax.random.PRNGKey(0)
    kx, kp = jax.random.split(key)
    x = jax.random.normal(kx, (B, S, E), jnp.float32)

    params = init_params(kp)
    kparams = to_kernel_params(params)
    bias_stack = make_masked_bias_stack(S, B, POSITION)
    alibi = make_alibi_bias(S, POSITION)

    out, attn_w = transformer_decoder_layer(x, kparams, bias_stack, return_attn_weights=True)
    jax.block_until_ready((out, attn_w))

    ref_out, ref_attn = reference_forward(x, params, alibi)
    np.testing.assert_allclose(np.asarray(out), np.asarray(ref_out), rtol=2e-2, atol=2e-2)
    np.testing.assert_allclose(np.asarray(attn_w), np.asarray(ref_attn), rtol=2e-2, atol=2e-2)

    print("KERNEL_OK")
</pallas_src>

<mosaic_0001>
module attributes {stable_mosaic.version = 11 : i64} {
  func.func @decoder_layer_kernel(%arg0: memref<16x32xf32, #tpu.memory_space<vmem>>, %arg1: memref<32x96xbf16, #tpu.memory_space<vmem>>, %arg2: memref<1x96xf32, #tpu.memory_space<vmem>>, %arg3: memref<32x32xbf16, #tpu.memory_space<vmem>>, %arg4: memref<32x64xbf16, #tpu.memory_space<vmem>>, %arg5: memref<1x64xf32, #tpu.memory_space<vmem>>, %arg6: memref<64x32xbf16, #tpu.memory_space<vmem>>, %arg7: memref<6x32xf32, #tpu.memory_space<vmem>>, %arg8: memref<8x8x8xf32, #tpu.memory_space<vmem>>, %arg9: memref<16x64xf32, #tpu.memory_space<vmem>>) attributes {dimension_semantics = [], scalar_prefetch = 0 : i64, scratch_operands = 0 : i64, tpu.core_type = #tpu.core_type<tc>} {
    %c0 = arith.constant 0 : index
    %c0_0 = arith.constant 0 : index
    %0 = vector.load %arg0[%c0, %c0_0] : memref<16x32xf32, #tpu.memory_space<vmem>>, vector<16x32xf32>
    %1 = arith.truncf %0 : vector<16x32xf32> to vector<16x32xbf16>
    %c0_1 = arith.constant 0 : index
    %c0_2 = arith.constant 0 : index
    %2 = vector.load %arg1[%c0_1, %c0_2] : memref<32x96xbf16, #tpu.memory_space<vmem>>, vector<32x96xbf16>
    %cst = arith.constant dense<0.000000e+00> : vector<16x96xf32>
    %3 = tpu.matmul %1, %2, %cst {dimension_numbers = #tpu.dot_dimension_numbers<[1], [0], [0], [1], [0, 0, 1, 1], [], []>} : vector<16x32xbf16>, vector<32x96xbf16>, vector<16x96xf32> -> vector<16x96xf32>
    %c0_3 = arith.constant 0 : index
    %c0_4 = arith.constant 0 : index
    %4 = vector.load %arg2[%c0_3, %c0_4] : memref<1x96xf32, #tpu.memory_space<vmem>>, vector<1x96xf32>
    %5 = vector.broadcast %4 : vector<1x96xf32> to vector<16x96xf32>
    %6 = arith.addf %3, %5 : vector<16x96xf32>
    %7 = arith.truncf %6 : vector<16x96xf32> to vector<16x96xbf16>
    %8 = vector.extract_strided_slice %7 {offsets = [0, 0], sizes = [16, 8], strides = [1, 1]} : vector<16x96xbf16> to vector<16x8xbf16>
    %9 = vector.shape_cast %8 : vector<16x8xbf16> to vector<2x8x8xbf16>
    %10 = vector.extract_strided_slice %7 {offsets = [0, 8], sizes = [16, 8], strides = [1, 1]} : vector<16x96xbf16> to vector<16x8xbf16>
    %11 = vector.shape_cast %10 : vector<16x8xbf16> to vector<2x8x8xbf16>
    %12 = vector.extract_strided_slice %7 {offsets = [0, 16], sizes = [16, 8], strides = [1, 1]} : vector<16x96xbf16> to vector<16x8xbf16>
    %13 = vector.shape_cast %12 : vector<16x8xbf16> to vector<2x8x8xbf16>
    %14 = vector.extract_strided_slice %7 {offsets = [0, 24], sizes = [16, 8], strides = [1, 1]} : vector<16x96xbf16> to vector<16x8xbf16>
    %15 = vector.shape_cast %14 : vector<16x8xbf16> to vector<2x8x8xbf16>
    %16 = tpu.concatenate %9, %11, %13, %15 in 0 : vector<2x8x8xbf16>, vector<2x8x8xbf16>, vector<2x8x8xbf16>, vector<2x8x8xbf16> -> vector<8x8x8xbf16>
    %17 = vector.extract_strided_slice %7 {offsets = [0, 32], sizes = [16, 8], strides = [1, 1]} : vector<16x96xbf16> to vector<16x8xbf16>
    %18 = vector.shape_cast %17 : vector<16x8xbf16> to vector<2x8x8xbf16>
    %19 = vector.extract_strided_slice %7 {offsets = [0, 40], sizes = [16, 8], strides = [1, 1]} : vector<16x96xbf16> to vector<16x8xbf16>
    %20 = vector.shape_cast %19 : vector<16x8xbf16> to vector<2x8x8xbf16>
    %21 = vector.extract_strided_slice %7 {offsets = [0, 48], sizes = [16, 8], strides = [1, 1]} : vector<16x96xbf16> to vector<16x8xbf16>
    %22 = vector.shape_cast %21 : vector<16x8xbf16> to vector<2x8x8xbf16>
    %23 = vector.extract_strided_slice %7 {offsets = [0, 56], sizes = [16, 8], strides = [1, 1]} : vector<16x96xbf16> to vector<16x8xbf16>
    %24 = vector.shape_cast %23 : vector<16x8xbf16> to vector<2x8x8xbf16>
    %25 = tpu.concatenate %18, %20, %22, %24 in 0 : vector<2x8x8xbf16>, vector<2x8x8xbf16>, vector<2x8x8xbf16>, vector<2x8x8xbf16> -> vector<8x8x8xbf16>
    %26 = vector.extract_strided_slice %7 {offsets = [0, 64], sizes = [16, 8], strides = [1, 1]} : vector<16x96xbf16> to vector<16x8xbf16>
    %27 = vector.shape_cast %26 : vector<16x8xbf16> to vector<2x8x8xbf16>
    %28 = vector.extract_strided_slice %7 {offsets = [0, 72], sizes = [16, 8], strides = [1, 1]} : vector<16x96xbf16> to vector<16x8xbf16>
    %29 = vector.shape_cast %28 : vector<16x8xbf16> to vector<2x8x8xbf16>
    %30 = vector.extract_strided_slice %7 {offsets = [0, 80], sizes = [16, 8], strides = [1, 1]} : vector<16x96xbf16> to vector<16x8xbf16>
    %31 = vector.shape_cast %30 : vector<16x8xbf16> to vector<2x8x8xbf16>
    %32 = vector.extract_strided_slice %7 {offsets = [0, 88], sizes = [16, 8], strides = [1, 1]} : vector<16x96xbf16> to vector<16x8xbf16>
    %33 = vector.shape_cast %32 : vector<16x8xbf16> to vector<2x8x8xbf16>
    %34 = tpu.concatenate %27, %29, %31, %33 in 0 : vector<2x8x8xbf16>, vector<2x8x8xbf16>, vector<2x8x8xbf16>, vector<2x8x8xbf16> -> vector<8x8x8xbf16>
    "tpu.trace_start"() <{level = 10 : i32, message = "nqd,nkd->nqk"}> : () -> ()
    %cst_5 = arith.constant dense<0.000000e+00> : vector<8x8x8xf32>
    %35 = tpu.matmul %16, %25, %cst_5 {dimension_numbers = #tpu.dot_dimension_numbers<[2], [2], [1], [1], [0, 0, 0, 1, 1, 1], [0], [0]>} : vector<8x8x8xbf16>, vector<8x8x8xbf16>, vector<8x8x8xf32> -> vector<8x8x8xf32>
    "tpu.trace_stop"() : () -> ()
    %c0_6 = arith.constant 0 : index
    %c0_7 = arith.constant 0 : index
    %c0_8 = arith.constant 0 : index
    %36 = vector.load %arg8[%c0_6, %c0_7, %c0_8] : memref<8x8x8xf32, #tpu.memory_space<vmem>>, vector<8x8x8xf32>
    %37 = arith.addf %35, %36 : vector<8x8x8xf32>
    %cst_9 = arith.constant dense<0xFF800000> : vector<8x8xf32>
    %38 = vector.multi_reduction <maximumf>, %37, %cst_9 [2] : vector<8x8x8xf32> to vector<8x8xf32>
    %39 = vector.shape_cast %38 : vector<8x8xf32> to vector<8x8x1xf32>
    %40 = vector.broadcast %39 : vector<8x8x1xf32> to vector<8x8x8xf32>
    %41 = arith.subf %37, %40 : vector<8x8x8xf32>
    %42 = math.exp %41 : vector<8x8x8xf32>
    %cst_10 = arith.constant dense<0.000000e+00> : vector<8x8xf32>
    %43 = vector.multi_reduction <add>, %42, %cst_10 [2] : vector<8x8x8xf32> to vector<8x8xf32>
    %44 = vector.shape_cast %43 : vector<8x8xf32> to vector<8x8x1xf32>
    %45 = tpu.reciprocal %44 {approx = true} : vector<8x8x1xf32> -> vector<8x8x1xf32>
    %46 = vector.broadcast %45 : vector<8x8x1xf32> to vector<8x8x8xf32>
    %47 = arith.mulf %42, %46 : vector<8x8x8xf32>
    %48 = arith.truncf %47 : vector<8x8x8xf32> to vector<8x8x8xbf16>
    "tpu.trace_start"() <{level = 10 : i32, message = "nqk,nkd->nqd"}> : () -> ()
    %cst_11 = arith.constant dense<0.000000e+00> : vector<8x8x8xf32>
    %49 = tpu.matmul %48, %34, %cst_11 {dimension_numbers = #tpu.dot_dimension_numbers<[2], [1], [1], [2], [0, 0, 0, 1, 1, 2], [0], [0]>} : vector<8x8x8xbf16>, vector<8x8x8xbf16>, vector<8x8x8xf32> -> vector<8x8x8xf32>
    "tpu.trace_stop"() : () -> ()
    %50 = vector.extract_strided_slice %49 {offsets = [0, 0, 0], sizes = [2, 8, 8], strides = [1, 1, 1]} : vector<8x8x8xf32> to vector<2x8x8xf32>
    %51 = vector.shape_cast %50 : vector<2x8x8xf32> to vector<16x8xf32>
    %52 = vector.extract_strided_slice %49 {offsets = [2, 0, 0], sizes = [2, 8, 8], strides = [1, 1, 1]} : vector<8x8x8xf32> to vector<2x8x8xf32>
    %53 = vector.shape_cast %52 : vector<2x8x8xf32> to vector<16x8xf32>
    %54 = vector.extract_strided_slice %49 {offsets = [4, 0, 0], sizes = [2, 8, 8], strides = [1, 1, 1]} : vector<8x8x8xf32> to vector<2x8x8xf32>
    %55 = vector.shape_cast %54 : vector<2x8x8xf32> to vector<16x8xf32>
    %56 = vector.extract_strided_slice %49 {offsets = [6, 0, 0], sizes = [2, 8, 8], strides = [1, 1, 1]} : vector<8x8x8xf32> to vector<2x8x8xf32>
    %57 = vector.shape_cast %56 : vector<2x8x8xf32> to vector<16x8xf32>
    %58 = tpu.concatenate %51, %53, %55, %57 in 1 : vector<16x8xf32>, vector<16x8xf32>, vector<16x8xf32>, vector<16x8xf32> -> vector<16x32xf32>
    %59 = arith.truncf %58 : vector<16x32xf32> to vector<16x32xbf16>
    %c0_12 = arith.constant 0 : index
    %c0_13 = arith.constant 0 : index
    %60 = vector.load %arg3[%c0_12, %c0_13] : memref<32x32xbf16, #tpu.memory_space<vmem>>, vector<32x32xbf16>
    %cst_14 = arith.constant dense<0.000000e+00> : vector<16x32xf32>
    %61 = tpu.matmul %59, %60, %cst_14 {dimension_numbers = #tpu.dot_dimension_numbers<[1], [0], [0], [1], [0, 0, 1, 1], [], []>} : vector<16x32xbf16>, vector<32x32xbf16>, vector<16x32xf32> -> vector<16x32xf32>
    %c0_15 = arith.constant 0 : index
    %c0_16 = arith.constant 0 : index
    %62 = vector.load %arg7[%c0_15, %c0_16] : memref<6x32xf32, #tpu.memory_space<vmem>>, vector<1x32xf32>
    %63 = vector.broadcast %62 : vector<1x32xf32> to vector<16x32xf32>
    %64 = arith.addf %61, %63 : vector<16x32xf32>
    %65 = arith.addf %0, %64 : vector<16x32xf32>
    %c1 = arith.constant 1 : index
    %c0_17 = arith.constant 0 : index
    %66 = vector.load %arg7[%c1, %c0_17] : memref<6x32xf32, #tpu.memory_space<vmem>>, vector<1x32xf32>
    %c2 = arith.constant 2 : index
    %c0_18 = arith.constant 0 : index
    %67 = vector.load %arg7[%c2, %c0_18] : memref<6x32xf32, #tpu.memory_space<vmem>>, vector<1x32xf32>
    %cst_19 = arith.constant dense<0.000000e+00> : vector<16xf32>
    %68 = vector.multi_reduction <add>, %65, %cst_19 [1] : vector<16x32xf32> to vector<16xf32>
    %69 = vector.shape_cast %68 : vector<16xf32> to vector<16x1xf32>
    %cst_20 = arith.constant 3.200000e+01 : f32
    %70 = vector.broadcast %cst_20 : f32 to vector<16x1xf32>
    %71 = arith.divf %69, %70 : vector<16x1xf32>
    %72 = vector.broadcast %71 : vector<16x1xf32> to vector<16x32xf32>
    %73 = arith.subf %65, %72 : vector<16x32xf32>
    %74 = arith.mulf %73, %73 : vector<16x32xf32>
    %cst_21 = arith.constant dense<0.000000e+00> : vector<16xf32>
    %75 = vector.multi_reduction <add>, %74, %cst_21 [1] : vector<16x32xf32> to vector<16xf32>
    %76 = vector.shape_cast %75 : vector<16xf32> to vector<16x1xf32>
    %cst_22 = arith.constant 3.200000e+01 : f32
    %77 = vector.broadcast %cst_22 : f32 to vector<16x1xf32>
    %78 = arith.divf %76, %77 : vector<16x1xf32>
    %cst_23 = arith.constant 9.99999974E-6 : f32
    %79 = vector.broadcast %cst_23 : f32 to vector<16x1xf32>
    %80 = arith.addf %78, %79 : vector<16x1xf32>
    %81 = math.rsqrt %80 : vector<16x1xf32>
    %82 = vector.broadcast %81 : vector<16x1xf32> to vector<16x32xf32>
    %83 = arith.mulf %73, %82 : vector<16x32xf32>
    %84 = vector.broadcast %66 : vector<1x32xf32> to vector<16x32xf32>
    %85 = arith.mulf %83, %84 : vector<16x32xf32>
    %86 = vector.broadcast %67 : vector<1x32xf32> to vector<16x32xf32>
    %87 = arith.addf %85, %86 : vector<16x32xf32>
    %88 = arith.truncf %87 : vector<16x32xf32> to vector<16x32xbf16>
    %c0_24 = arith.constant 0 : index
    %c0_25 = arith.constant 0 : index
    %89 = vector.load %arg4[%c0_24, %c0_25] : memref<32x64xbf16, #tpu.memory_space<vmem>>, vector<32x64xbf16>
    %cst_26 = arith.constant dense<0.000000e+00> : vector<16x64xf32>
    %90 = tpu.matmul %88, %89, %cst_26 {dimension_numbers = #tpu.dot_dimension_numbers<[1], [0], [0], [1], [0, 0, 1, 1], [], []>} : vector<16x32xbf16>, vector<32x64xbf16>, vector<16x64xf32> -> vector<16x64xf32>
    %c0_27 = arith.constant 0 : index
    %c0_28 = arith.constant 0 : index
    %91 = vector.load %arg5[%c0_27, %c0_28] : memref<1x64xf32, #tpu.memory_space<vmem>>, vector<1x64xf32>
    %92 = vector.broadcast %91 : vector<1x64xf32> to vector<16x64xf32>
    %93 = arith.addf %90, %92 : vector<16x64xf32>
    %cst_29 = arith.constant 0.000000e+00 : f32
    %94 = vector.broadcast %cst_29 : f32 to vector<16x64xf32>
    %95 = arith.maximumf %93, %94 : vector<16x64xf32>
    %96 = arith.truncf %95 : vector<16x64xf32> to vector<16x64xbf16>
    %c0_30 = arith.constant 0 : index
    %c0_31 = arith.constant 0 : index
    %97 = vector.load %arg6[%c0_30, %c0_31] : memref<64x32xbf16, #tpu.memory_space<vmem>>, vector<64x32xbf16>
    %cst_32 = arith.constant dense<0.000000e+00> : vector<16x32xf32>
    %98 = tpu.matmul %96, %97, %cst_32 {dimension_numbers = #tpu.dot_dimension_numbers<[1], [0], [0], [1], [0, 0, 1, 1], [], []>} : vector<16x64xbf16>, vector<64x32xbf16>, vector<16x32xf32> -> vector<16x32xf32>
    %c3 = arith.constant 3 : index
    %c0_33 = arith.constant 0 : index
    %99 = vector.load %arg7[%c3, %c0_33] : memref<6x32xf32, #tpu.memory_space<vmem>>, vector<1x32xf32>
    %100 = vector.broadcast %99 : vector<1x32xf32> to vector<16x32xf32>
    %101 = arith.addf %98, %100 : vector<16x32xf32>
    %102 = arith.addf %87, %101 : vector<16x32xf32>
    %c4 = arith.constant 4 : index
    %c0_34 = arith.constant 0 : index
    %103 = vector.load %arg7[%c4, %c0_34] : memref<6x32xf32, #tpu.memory_space<vmem>>, vector<1x32xf32>
    %c5 = arith.constant 5 : index
    %c0_35 = arith.constant 0 : index
    %104 = vector.load %arg7[%c5, %c0_35] : memref<6x32xf32, #tpu.memory_space<vmem>>, vector<1x32xf32>
    %cst_36 = arith.constant dense<0.000000e+00> : vector<16xf32>
    %105 = vector.multi_reduction <add>, %102, %cst_36 [1] : vector<16x32xf32> to vector<16xf32>
    %106 = vector.shape_cast %105 : vector<16xf32> to vector<16x1xf32>
    %cst_37 = arith.constant 3.200000e+01 : f32
    %107 = vector.broadcast %cst_37 : f32 to vector<16x1xf32>
    %108 = arith.divf %106, %107 : vector<16x1xf32>
    %109 = vector.broadcast %108 : vector<16x1xf32> to vector<16x32xf32>
    %110 = arith.subf %102, %109 : vector<16x32xf32>
    %111 = arith.mulf %110, %110 : vector<16x32xf32>
    %cst_38 = arith.constant dense<0.000000e+00> : vector<16xf32>
    %112 = vector.multi_reduction <add>, %111, %cst_38 [1] : vector<16x32xf32> to vector<16xf32>
    %113 = vector.shape_cast %112 : vector<16xf32> to vector<16x1xf32>
    %cst_39 = arith.constant 3.200000e+01 : f32
    %114 = vector.broadcast %cst_39 : f32 to vector<16x1xf32>
    %115 = arith.divf %113, %114 : vector<16x1xf32>
    %cst_40 = arith.constant 9.99999974E-6 : f32
    %116 = vector.broadcast %cst_40 : f32 to vector<16x1xf32>
    %117 = arith.addf %115, %116 : vector<16x1xf32>
    %118 = math.rsqrt %117 : vector<16x1xf32>
    %119 = vector.broadcast %118 : vector<16x1xf32> to vector<16x32xf32>
    %120 = arith.mulf %110, %119 : vector<16x32xf32>
    %121 = vector.broadcast %103 : vector<1x32xf32> to vector<16x32xf32>
    %122 = arith.mulf %120, %121 : vector<16x32xf32>
    %123 = vector.broadcast %104 : vector<1x32xf32> to vector<16x32xf32>
    %124 = arith.addf %122, %123 : vector<16x32xf32>
    %125 = vector.extract_strided_slice %47 {offsets = [0, 0, 0], sizes = [2, 8, 8], strides = [1, 1, 1]} : vector<8x8x8xf32> to vector<2x8x8xf32>
    %126 = vector.shape_cast %125 : vector<2x8x8xf32> to vector<16x8xf32>
    %127 = vector.extract_strided_slice %47 {offsets = [2, 0, 0], sizes = [2, 8, 8], strides = [1, 1, 1]} : vector<8x8x8xf32> to vector<2x8x8xf32>
    %128 = vector.shape_cast %127 : vector<2x8x8xf32> to vector<16x8xf32>
    %129 = vector.extract_strided_slice %47 {offsets = [4, 0, 0], sizes = [2, 8, 8], strides = [1, 1, 1]} : vector<8x8x8xf32> to vector<2x8x8xf32>
    %130 = vector.shape_cast %129 : vector<2x8x8xf32> to vector<16x8xf32>
    %131 = vector.extract_strided_slice %47 {offsets = [6, 0, 0], sizes = [2, 8, 8], strides = [1, 1, 1]} : vector<8x8x8xf32> to vector<2x8x8xf32>
    %132 = vector.shape_cast %131 : vector<2x8x8xf32> to vector<16x8xf32>
    %133 = tpu.concatenate %126, %128, %130, %132 in 1 : vector<16x8xf32>, vector<16x8xf32>, vector<16x8xf32>, vector<16x8xf32> -> vector<16x32xf32>
    %134 = tpu.concatenate %124, %133 in 1 : vector<16x32xf32>, vector<16x32xf32> -> vector<16x64xf32>
    %c0_41 = arith.constant 0 : index
    %c0_42 = arith.constant 0 : index
    %135 = vector.load %arg9[%c0_41, %c0_42] : memref<16x64xf32, #tpu.memory_space<vmem>>, vector<16x64xf32>
    tpu.vector_store %arg9[%c0_41, %c0_42], %134 {strides = array<i32>} : memref<16x64xf32, #tpu.memory_space<vmem>>, vector<16x64xf32>,
    return
  }
}

</mosaic_0001>

<llo_original>
// kernel: tpu_custom_call.1
$region0: #{tpu_custom_call.1}
  #allocation0 [shape = 'u32[]', space=smem, size = 0x4, offset = 0x4, fixed_abs, tag = 'smem constant byte address 0x4 - core index']
  #allocation1 [shape = 'u32[144,128]{1,0:T(1,128)}', space=vmem, size = 0x12000, scoped, tag = 'internal scratch']
  %s0 = inlined_call_operand.hbm [shape: f32[16,32], index: 0, kind: input, shape index: {}]
  %s1 = inlined_call_operand.hbm [shape: bf16[32,96], index: 1, kind: input, shape index: {}]
  %s2 = inlined_call_operand.vmem [shape: f32[1,96], index: 2, kind: input, shape index: {}]
  %s3 = inlined_call_operand.hbm [shape: bf16[32,32], index: 3, kind: input, shape index: {}]
  %s4 = inlined_call_operand.hbm [shape: bf16[32,64], index: 4, kind: input, shape index: {}]
  %s5 = inlined_call_operand.vmem [shape: f32[1,64], index: 5, kind: input, shape index: {}]
  %s6 = inlined_call_operand.vmem [shape: bf16[64,32], index: 6, kind: input, shape index: {}]
  %s7 = inlined_call_operand.vmem [shape: f32[6,32], index: 7, kind: input, shape index: {}]
  %s8 = inlined_call_operand.vmem [shape: f32[8,8,8], index: 8, kind: input, shape index: {}]
  %s9 = inlined_call_operand.hbm [shape: f32[16,64], index: 9, kind: output, shape index: {}]
  %s10 = sld [smem:[#allocation0]]
  $region62: #{tpu_custom_call.1} parent=0
    _
  %s12 = ssub.s32 1, %s10
  %s13 = scalar_select 0, %s12, %s10
  $region1: #{tpu_custom_call.1} parent=0
    #allocation2 [shape = 'u8[8192]{0}', space=vmem, size = 0x2000, scoped, tag = 'input window, operand 0, single buffered']
    #allocation3 [shape = 's32[1]{0}', space=sflag, size = 0x4, scoped, tag = 'scoped memory for tpu_custom_call.1']
    #allocation4 [shape = 's32[1]{0}', space=sflag, size = 0x4, scoped, tag = 'scoped memory for tpu_custom_call.1']
    #allocation5 [shape = 'u8[8192]{0}', space=vmem, size = 0x2000, scoped, tag = 'input window, operand 1, single buffered']
    #allocation6 [shape = 's32[1]{0}', space=sflag, size = 0x4, scoped, tag = 'scoped memory for tpu_custom_call.1']
    #allocation7 [shape = 'u8[8192]{0}', space=vmem, size = 0x2000, scoped, tag = 'input window, operand 3, single buffered']
    #allocation8 [shape = 'u8[8192]{0}', space=vmem, size = 0x2000, scoped, tag = 'input window, operand 4, single buffered']
    #allocation9 [shape = 's32[1]{0}', space=sflag, size = 0x4, scoped, tag = 'scoped memory for tpu_custom_call.1']
    #allocation10 [shape = 'u8[8192]{0}', space=vmem, size = 0x2000, scoped, tag = 'output window, operand 0, single buffered']
    %14 = vsyncpa [#allocation3], 0
    %15 = vsyncpa [#allocation6], 0
    %16 = vsyncpa [#allocation9], 0
    %17 = vsyncpa [#allocation4], 0
    // Predicated region
    $region2: #{tpu_custom_call.1} parent=1 // pred_check
      _
    $region3: #{tpu_custom_call.1} parent=1 // pred_check_branch
      %19 = sbr.rel (0) target = $region5
    $region4: #{tpu_custom_call.1} parent=1 // pred_region
      %s21 = ssub.s32 256, 256
      %22 = vsyncadd [#allocation3], %s21
      %s23 = sshll.u32 [#allocation2], 4
      %s24 = int_to_ptr.vmem [resolvable:$true] %s23
      %29 = dma.hbm_to_vmem [thread:$0]  %s0, 256, %s24, [#allocation3], 128, 128, 8
    $region5: #{tpu_custom_call.1} parent=1 // pred_fallthru
      _
    // Predicated region
    $region6: #{tpu_custom_call.1} parent=1 // pred_check
      _
    $region7: #{tpu_custom_call.1} parent=1 // pred_check_branch
      %31 = sbr.rel (0) target = $region9
    $region8: #{tpu_custom_call.1} parent=1 // pred_region
      %s33 = ssub.s32 256, 256
      %34 = vsyncadd [#allocation6], %s33
      %s35 = sshll.u32 [#allocation5], 4
      %s36 = int_to_ptr.vmem [resolvable:$true] %s35
      %41 = dma.hbm_to_vmem [thread:$0]  %s1, 256, %s36, [#allocation6], 64, 64, 4
    $region9: #{tpu_custom_call.1} parent=1 // pred_fallthru
      _
    // Predicated region
    $region10: #{tpu_custom_call.1} parent=1 // pred_check
      _
    $region11: #{tpu_custom_call.1} parent=1 // pred_check_branch
      %43 = sbr.rel (0) target = $region13
    $region12: #{tpu_custom_call.1} parent=1 // pred_region
      _
    $region13: #{tpu_custom_call.1} parent=1 // pred_fallthru
      _
    // Predicated region
    $region14: #{tpu_custom_call.1} parent=1 // pred_check
      _
    $region15: #{tpu_custom_call.1} parent=1 // pred_check_branch
      %45 = sbr.rel (0) target = $region17
    $region16: #{tpu_custom_call.1} parent=1 // pred_region
      %s47 = ssub.s32 256, 256
      %48 = vsyncadd [#allocation6], %s47
      %s49 = sshll.u32 [#allocation7], 4
      %s50 = int_to_ptr.vmem [resolvable:$true] %s49
      %55 = dma.hbm_to_vmem [thread:$0]  %s3, 256, %s50, [#allocation6], 64, 64, 4
    $region17: #{tpu_custom_call.1} parent=1 // pred_fallthru
      _
    // Predicated region
    $region18: #{tpu_custom_call.1} parent=1 // pred_check
      _
    $region19: #{tpu_custom_call.1} parent=1 // pred_check_branch
      %57 = sbr.rel (0) target = $region21
    $region20: #{tpu_custom_call.1} parent=1 // pred_region
      %s59 = ssub.s32 256, 256
      %60 = vsyncadd [#allocation9], %s59
      %s61 = sshll.u32 [#allocation8], 4
      %s62 = int_to_ptr.vmem [resolvable:$true] %s61
      %67 = dma.hbm_to_vmem [thread:$0]  %s4, 256, %s62, [#allocation9], 64, 64, 4
    $region21: #{tpu_custom_call.1} parent=1 // pred_fallthru
      _
    // Predicated region
    $region22: #{tpu_custom_call.1} parent=1 // pred_check
      _
    $region23: #{tpu_custom_call.1} parent=1 // pred_check_branch
      %69 = sbr.rel (0) target = $region25
    $region24: #{tpu_custom_call.1} parent=1 // pred_region
      _
    $region25: #{tpu_custom_call.1} parent=1 // pred_fallthru
      _
    // Predicated region
    $region26: #{tpu_custom_call.1} parent=1 // pred_check
      _
    $region27: #{tpu_custom_call.1} parent=1 // pred_check_branch
      %71 = sbr.rel (0) target = $region29
    $region28: #{tpu_custom_call.1} parent=1 // pred_region
      _
    $region29: #{tpu_custom_call.1} parent=1 // pred_fallthru
      _
    // Predicated region
    $region30: #{tpu_custom_call.1} parent=1 // pred_check
      _
    $region31: #{tpu_custom_call.1} parent=1 // pred_check_branch
      %73 = sbr.rel (0) target = $region33
    $region32: #{tpu_custom_call.1} parent=1 // pred_region
      _
    $region33: #{tpu_custom_call.1} parent=1 // pred_fallthru
      _
    // Predicated region
    $region34: #{tpu_custom_call.1} parent=1 // pred_check
      _
    $region35: #{tpu_custom_call.1} parent=1 // pred_check_branch
      %75 = sbr.rel (0) target = $region37
    $region36: #{tpu_custom_call.1} parent=1 // pred_region
      _
    $region37: #{tpu_custom_call.1} parent=1 // pred_fallthru
      _
    // Predicated region
    $region38: #{tpu_custom_call.1} parent=1 // pred_check
      _
    $region39: #{tpu_custom_call.1} parent=1 // pred_check_branch
      %77 = sbr.rel (0) target = $region41
    $region40: #{tpu_custom_call.1} parent=1 // pred_region
      %78 = dma.done [#allocation3], 256
    $region41: #{tpu_custom_call.1} parent=1 // pred_fallthru
      _
    // Predicated region
    $region42: #{tpu_custom_call.1} parent=1 // pred_check
      _
    $region43: #{tpu_custom_call.1} parent=1 // pred_check_branch
      %80 = sbr.rel (0) target = $region45
    $region44: #{tpu_custom_call.1} parent=1 // pred_region
      %81 = dma.done [#allocation6], 256
    $region45: #{tpu_custom_call.1} parent=1 // pred_fallthru
      _
    // Predicated region
    $region46: #{tpu_custom_call.1} parent=1 // pred_check
      _
    $region47: #{tpu_custom_call.1} parent=1 // pred_check_branch
      %83 = sbr.rel (0) target = $region49
    $region48: #{tpu_custom_call.1} parent=1 // pred_region
      %84 = dma.done [#allocation6], 256
    $region49: #{tpu_custom_call.1} parent=1 // pred_fallthru
      _
    // Predicated region
    $region50: #{tpu_custom_call.1} parent=1 // pred_check
      _
    $region51: #{tpu_custom_call.1} parent=1 // pred_check_branch
      %86 = sbr.rel (0) target = $region53
    $region52: #{tpu_custom_call.1} parent=1 // pred_region
      %87 = dma.done [#allocation9], 256
    $region53: #{tpu_custom_call.1} parent=1 // pred_fallthru
      _
    %v89 = vld [vmem:[#allocation2] sm:$0xff]
    %v90 = vld [vmem:[#allocation2 + $0x8] sm:$0xff]
    %v91 = vpack.c.bf16 %v90, %v89
    %v92 = vld [vmem:[#allocation5] sm:$0xf]
    %v93 = vld [vmem:[#allocation5 + $0x4] sm:$0xf]
    %v94 = vld [vmem:[#allocation5 + $0x8] sm:$0xf]
    %v95 = vld [vmem:[#allocation5 + $0xc] sm:$0xf]
    %v96 = vld [vmem:[%s2] sm:$0x1]
    %v98 = vlaneseq
    %v99 = vshrl.u32 %v98, 7
    %v100 = vsub.s32 0, %v99
    %v101 = vrot.slane %v96, %v100
    %v107 = vunpack.c.l.b16 %v92
    %v108 = vunpack.c.l.b16 %v93
    %v109 = vunpack.c.l.b16 %v94
    %v110 = vunpack.c.l.b16 %v95
    %v111 = vpack.c.b16 %v108, %v107
    %v112 = vpack.c.b16 %v110, %v109
    %vm115 = vcmask 261120
    %v117 = vsel %vm115, %v91, 0
    %119 = vmatprep.subr.bf16.mxu0 0
    %120 = vmatpush1.bf16.msra.mxu0 %v111
    %121 = vmatprep.subr.bf16.mxu0 0
    %122 = vmatpush1.bf16.msra.mxu0 %v112
    %123 = vmatprep.subr.bf16.mxu0 0
    %124 = vmatpush1.bf16.msra.mxu0 0
    %125 = vmatprep.subr.bf16.mxu0 0
    %126 = vmatpush1.bf16.msra.mxu0 0
    %127 = vmatprep.subr.bf16.mxu0 0
    %128 = vmatpush1.bf16.msra.mxu0 0
    %129 = vmatprep.subr.bf16.mxu0 0
    %130 = vmatpush1.bf16.msra.mxu0 0
    %131 = vmatprep.subr.bf16.mxu0 0
    %132 = vmatpush1.bf16.msra.mxu0 0
    %133 = vmatprep.subr.bf16.mxu0 0
    %134 = vmatpush1.bf16.msra.mxu0 0
    %135 = vmatprep.subr.bf16.mxu0 0
    %136 = vmatpush1.bf16.msra.mxu0 0
    %137 = vmatprep.subr.bf16.mxu0 0
    %138 = vmatpush1.bf16.msra.mxu0 0
    %139 = vmatprep.subr.bf16.mxu0 0
    %140 = vmatpush1.bf16.msra.mxu0 0
    %141 = vmatprep.subr.bf16.mxu0 0
    %142 = vmatpush1.bf16.msra.mxu0 0
    %143 = vmatprep.subr.bf16.mxu0 0
    %144 = vmatpush1.bf16.msra.mxu0 0
    %145 = vmatprep.subr.bf16.mxu0 0
    %146 = vmatpush1.bf16.msra.mxu0 0
    %147 = vmatprep.subr.bf16.mxu0 0
    %148 = vmatpush1.bf16.msra.mxu0 0
    %149 = vmatprep.subr.bf16.mxu0 0
    %150 = vmatpush1.bf16.msra.mxu0 0
    %151 = vmatprep.mubr.bf16.mxu0 0
    %152 = vmatmul.mubr.bf16.gmra.mrb[0].mxu0 %v117
    %v153 = vpop.f32.mrb[0].mxu0
    %v154 = vadd.f32 %v101, %v153
    %v155 = vpop.f32.mrb[0].mxu0
    %v156 = vpop.f32.mrb[0].mxu0
    %v157 = vadd.f32 %v101, %v156
    %v158 = vpop.f32.mrb[0].mxu0
    %159 = vdwg.mxu0
    %v160 = vpack.c.bf16 %v157, %v154
    %v162 = vunpack.c.l.b16 %v160
    %v163 = vunpack.c.h.b16 %v160
    %v164 = vpack.c.b16 %v162, %v162
    %v165 = vpack.c.b16 %v163, %v163
    %166 = vrot.lane.b32.xlu0 %v164, 120
    %v167 = vpop.permute.xlu0 %166
    %168 = vrot.lane.b32.xlu0 %v165, 120
    %v169 = vpop.permute.xlu0 %168
    %170 = vrot.lane.b32.xlu0 %v164, 112
    %v171 = vpop.permute.xlu0 %170
    %172 = vrot.lane.b32.xlu0 %v165, 112
    %v173 = vpop.permute.xlu0 %172
    %174 = vrot.lane.b32.xlu0 %v164, 104
    %v175 = vpop.permute.xlu0 %174
    %176 = vrot.lane.b32.xlu0 %v165, 104
    %v177 = vpop.permute.xlu0 %176
    %v178 = vld [vmem:[%s8] sm:$0xff]
    %v179 = vld [vmem:[%s8 + $0x8] sm:$0xff]
    %v180 = vld [vmem:[%s8 + $0x10] sm:$0xff]
    %v181 = vld [vmem:[%s8 + $0x18] sm:$0xff]
    %v182 = vld [vmem:[%s8 + $0x20] sm:$0xff]
    %v183 = vld [vmem:[%s8 + $0x28] sm:$0xff]
    %v184 = vld [vmem:[%s8 + $0x30] sm:$0xff]
    %v185 = vld [vmem:[%s8 + $0x38] sm:$0xff]
    %186 = vrot.lane.b32.xlu0 %v164, 96
    %v187 = vpop.permute.xlu0 %186
    %vm188 = vcmask 64512
    %v190 = vsel %vm188, %v164, 0
    %v193 = vsel %vm188, %v187, 0
    %195 = vmatprep.subr.bf16.mxu0 0
    %196 = vmatpush1.bf16.xpose.msra.mxu0 %v193
    %197 = vmatprep.subr.bf16.mxu0 0
    %198 = vmatpush1.bf16.xpose.msra.mxu0 0
    %199 = vmatprep.subr.bf16.mxu0 0
    %200 = vmatpush1.bf16.xpose.msra.mxu0 0
    %201 = vmatprep.subr.bf16.mxu0 0
    %202 = vmatpush1.bf16.xpose.msra.mxu0 0
    %203 = vmatprep.subr.bf16.mxu0 0
    %204 = vmatpush1.bf16.xpose.msra.mxu0 0
    %205 = vmatprep.subr.bf16.mxu0 0
    %206 = vmatpush1.bf16.xpose.msra.mxu0 0
    %207 = vmatprep.subr.bf16.mxu0 0
    %208 = vmatpush1.bf16.xpose.msra.mxu0 0
    %209 = vmatprep.subr.bf16.mxu0 0
    %210 = vmatpush1.bf16.xpose.msra.mxu0 0
    %211 = vmatprep.subr.bf16.mxu0 0
    %212 = vmatpush1.bf16.xpose.msra.mxu0 0
    %213 = vmatprep.subr.bf16.mxu0 0
    %214 = vmatpush1.bf16.xpose.msra.mxu0 0
    %215 = vmatprep.subr.bf16.mxu0 0
    %216 = vmatpush1.bf16.xpose.msra.mxu0 0
    %217 = vmatprep.subr.bf16.mxu0 0
    %218 = vmatpush1.bf16.xpose.msra.mxu0 0
    %219 = vmatprep.subr.bf16.mxu0 0
    %220 = vmatpush1.bf16.xpose.msra.mxu0 0
    %221 = vmatprep.subr.bf16.mxu0 0
    %222 = vmatpush1.bf16.xpose.msra.mxu0 0
    %223 = vmatprep.subr.bf16.mxu0 0
    %224 = vmatpush1.bf16.xpose.msra.mxu0 0
    %225 = vmatprep.subr.bf16.mxu0 0
    %226 = vmatpush1.bf16.xpose.msra.mxu0 0
    %227 = vmatprep.mubr.bf16.mxu0 0
    %228 = vmatmul.mubr.bf16.gmra.mrb[0].mxu0 %v190
    %v229 = vpop.f32.mrb[0].mxu0
    %v230 = vadd.f32 %v178, %v229
    %v231 = vpop.f32.mrb[0].mxu0
    %v232 = vpop.f32.mrb[0].mxu0
    %v233 = vpop.f32.mrb[0].mxu0
    %234 = vdwg.mxu0
    %235 = vrot.lane.b32.xlu0 %v165, 96
    %v236 = vpop.permute.xlu0 %235
    %v238 = vsel %vm188, %v165, 0
    %v241 = vsel %vm188, %v236, 0
    %243 = vmatprep.subr.bf16.mxu0 0
    %244 = vmatpush1.bf16.xpose.msra.mxu0 %v241
    %245 = vmatprep.subr.bf16.mxu0 0
    %246 = vmatpush1.bf16.xpose.msra.mxu0 0
    %247 = vmatprep.subr.bf16.mxu0 0
    %248 = vmatpush1.bf16.xpose.msra.mxu0 0
    %249 = vmatprep.subr.bf16.mxu0 0
    %250 = vmatpush1.bf16.xpose.msra.mxu0 0
    %251 = vmatprep.subr.bf16.mxu0 0
    %252 = vmatpush1.bf16.xpose.msra.mxu0 0
    %253 = vmatprep.subr.bf16.mxu0 0
    %254 = vmatpush1.bf16.xpose.msra.mxu0 0
    %255 = vmatprep.subr.bf16.mxu0 0
    %256 = vmatpush1.bf16.xpose.msra.mxu0 0
    %257 = vmatprep.subr.bf16.mxu0 0
    %258 = vmatpush1.bf16.xpose.msra.mxu0 0
    %259 = vmatprep.subr.bf16.mxu0 0
    %260 = vmatpush1.bf16.xpose.msra.mxu0 0
    %261 = vmatprep.subr.bf16.mxu0 0
    %262 = vmatpush1.bf16.xpose.msra.mxu0 0
    %263 = vmatprep.subr.bf16.mxu0 0
    %264 = vmatpush1.bf16.xpose.msra.mxu0 0
    %265 = vmatprep.subr.bf16.mxu0 0
    %266 = vmatpush1.bf16.xpose.msra.mxu0 0
    %267 = vmatprep.subr.bf16.mxu0 0
    %268 = vmatpush1.bf16.xpose.msra.mxu0 0
    %269 = vmatprep.subr.bf16.mxu0 0
    %270 = vmatpush1.bf16.xpose.msra.mxu0 0
    %271 = vmatprep.subr.bf16.mxu0 0
    %272 = vmatpush1.bf16.xpose.msra.mxu0 0
    %273 = vmatprep.subr.bf16.mxu0 0
    %274 = vmatpush1.bf16.xpose.msra.mxu0 0
    %275 = vmatprep.mubr.bf16.mxu0 0
    %276 = vmatmul.mubr.bf16.gmra.mrb[0].mxu0 %v238
    %v277 = vpop.f32.mrb[0].mxu0
    %v278 = vadd.f32 %v179, %v277
    %v279 = vpop.f32.mrb[0].mxu0
    %v280 = vpop.f32.mrb[0].mxu0
    %v281 = vpop.f32.mrb[0].mxu0
    %282 = vdwg.mxu0
    %v283 = vunpack.c.l.b16 %v167
    %v284 = vpack.c.b16 %v283, %v283
    %285 = vrot.lane.b32.xlu0 %v284, 96
    %v286 = vpop.permute.xlu0 %285
    %v288 = vsel %vm188, %v167, 0
    %v291 = vsel %vm188, %v286, 0
    %293 = vmatprep.subr.bf16.mxu0 0
    %294 = vmatpush1.bf16.xpose.msra.mxu0 %v291
    %295 = vmatprep.subr.bf16.mxu0 0
    %296 = vmatpush1.bf16.xpose.msra.mxu0 0
    %297 = vmatprep.subr.bf16.mxu0 0
    %298 = vmatpush1.bf16.xpose.msra.mxu0 0
    %299 = vmatprep.subr.bf16.mxu0 0
    %300 = vmatpush1.bf16.xpose.msra.mxu0 0
    %301 = vmatprep.subr.bf16.mxu0 0
    %302 = vmatpush1.bf16.xpose.msra.mxu0 0
    %303 = vmatprep.subr.bf16.mxu0 0
    %304 = vmatpush1.bf16.xpose.msra.mxu0 0
    %305 = vmatprep.subr.bf16.mxu0 0
    %306 = vmatpush1.bf16.xpose.msra.mxu0 0
    %307 = vmatprep.subr.bf16.mxu0 0
    %308 = vmatpush1.bf16.xpose.msra.mxu0 0
    %309 = vmatprep.subr.bf16.mxu0 0
    %310 = vmatpush1.bf16.xpose.msra.mxu0 0
    %311 = vmatprep.subr.bf16.mxu0 0
    %312 = vmatpush1.bf16.xpose.msra.mxu0 0
    %313 = vmatprep.subr.bf16.mxu0 0
    %314 = vmatpush1.bf16.xpose.msra.mxu0 0
    %315 = vmatprep.subr.bf16.mxu0 0
    %316 = vmatpush1.bf16.xpose.msra.mxu0 0
    %317 = vmatprep.subr.bf16.mxu0 0
    %318 = vmatpush1.bf16.xpose.msra.mxu0 0
    %319 = vmatprep.subr.bf16.mxu0 0
    %320 = vmatpush1.bf16.xpose.msra.mxu0 0
    %321 = vmatprep.subr.bf16.mxu0 0
    %322 = vmatpush1.bf16.xpose.msra.mxu0 0
    %323 = vmatprep.subr.bf16.mxu0 0
    %324 = vmatpush1.bf16.xpose.msra.mxu0 0
    %325 = vmatprep.mubr.bf16.mxu0 0
    %326 = vmatmul.mubr.bf16.gmra.mrb[0].mxu0 %v288
    %v327 = vpop.f32.mrb[0].mxu0
    %v328 = vadd.f32 %v180, %v327
    %v329 = vpop.f32.mrb[0].mxu0
    %v330 = vpop.f32.mrb[0].mxu0
    %v331 = vpop.f32.mrb[0].mxu0
    %332 = vdwg.mxu0
    %v333 = vunpack.c.l.b16 %v169
    %v334 = vpack.c.b16 %v333, %v333
    %335 = vrot.lane.b32.xlu0 %v334, 96
    %v336 = vpop.permute.xlu0 %335
    %v338 = vsel %vm188, %v169, 0
    %v341 = vsel %vm188, %v336, 0
    %343 = vmatprep.subr.bf16.mxu0 0
    %344 = vmatpush1.bf16.xpose.msra.mxu0 %v341
    %345 = vmatprep.subr.bf16.mxu0 0
    %346 = vmatpush1.bf16.xpose.msra.mxu0 0
    %347 = vmatprep.subr.bf16.mxu0 0
    %348 = vmatpush1.bf16.xpose.msra.mxu0 0
    %349 = vmatprep.subr.bf16.mxu0 0
    %350 = vmatpush1.bf16.xpose.msra.mxu0 0
    %351 = vmatprep.subr.bf16.mxu0 0
    %352 = vmatpush1.bf16.xpose.msra.mxu0 0
    %353 = vmatprep.subr.bf16.mxu0 0
    %354 = vmatpush1.bf16.xpose.msra.mxu0 0
    %355 = vmatprep.subr.bf16.mxu0 0
    %356 = vmatpush1.bf16.xpose.msra.mxu0 0
    %357 = vmatprep.subr.bf16.mxu0 0
    %358 = vmatpush1.bf16.xpose.msra.mxu0 0
    %359 = vmatprep.subr.bf16.mxu0 0
    %360 = vmatpush1.bf16.xpose.msra.mxu0 0
    %361 = vmatprep.subr.bf16.mxu0 0
    %362 = vmatpush1.bf16.xpose.msra.mxu0 0
    %363 = vmatprep.subr.bf16.mxu0 0
    %364 = vmatpush1.bf16.xpose.msra.mxu0 0
    %365 = vmatprep.subr.bf16.mxu0 0
    %366 = vmatpush1.bf16.xpose.msra.mxu0 0
    %367 = vmatprep.subr.bf16.mxu0 0
    %368 = vmatpush1.bf16.xpose.msra.mxu0 0
    %369 = vmatprep.subr.bf16.mxu0 0
    %370 = vmatpush1.bf16.xpose.msra.mxu0 0
    %371 = vmatprep.subr.bf16.mxu0 0
    %372 = vmatpush1.bf16.xpose.msra.mxu0 0
    %373 = vmatprep.subr.bf16.mxu0 0
    %374 = vmatpush1.bf16.xpose.msra.mxu0 0
    %375 = vmatprep.mubr.bf16.mxu0 0
    %376 = vmatmul.mubr.bf16.gmra.mrb[0].mxu0 %v338
    %v377 = vpop.f32.mrb[0].mxu0
    %v378 = vadd.f32 %v181, %v377
    %v379 = vpop.f32.mrb[0].mxu0
    %v380 = vpop.f32.mrb[0].mxu0
    %v381 = vpop.f32.mrb[0].mxu0
    %382 = vdwg.mxu0
    %v383 = vunpack.c.l.b16 %v171
    %v384 = vpack.c.b16 %v383, %v383
    %385 = vrot.lane.b32.xlu0 %v384, 96
    %v386 = vpop.permute.xlu0 %385
    %v388 = vsel %vm188, %v171, 0
    %v391 = vsel %vm188, %v386, 0
    %393 = vmatprep.subr.bf16.mxu0 0
    %394 = vmatpush1.bf16.xpose.msra.mxu0 %v391
    %395 = vmatprep.subr.bf16.mxu0 0
    %396 = vmatpush1.bf16.xpose.msra.mxu0 0
    %397 = vmatprep.subr.bf16.mxu0 0
    %398 = vmatpush1.bf16.xpose.msra.mxu0 0
    %399 = vmatprep.subr.bf16.mxu0 0
    %400 = vmatpush1.bf16.xpose.msra.mxu0 0
    %401 = vmatprep.subr.bf16.mxu0 0
    %402 = vmatpush1.bf16.xpose.msra.mxu0 0
    %403 = vmatprep.subr.bf16.mxu0 0
    %404 = vmatpush1.bf16.xpose.msra.mxu0 0
    %405 = vmatprep.subr.bf16.mxu0 0
    %406 = vmatpush1.bf16.xpose.msra.mxu0 0
    %407 = vmatprep.subr.bf16.mxu0 0
    %408 = vmatpush1.bf16.xpose.msra.mxu0 0
    %409 = vmatprep.subr.bf16.mxu0 0
    %410 = vmatpush1.bf16.xpose.msra.mxu0 0
    %411 = vmatprep.subr.bf16.mxu0 0
    %412 = vmatpush1.bf16.xpose.msra.mxu0 0
    %413 = vmatprep.subr.bf16.mxu0 0
    %414 = vmatpush1.bf16.xpose.msra.mxu0 0
    %415 = vmatprep.subr.bf16.mxu0 0
    %416 = vmatpush1.bf16.xpose.msra.mxu0 0
    %417 = vmatprep.subr.bf16.mxu0 0
    %418 = vmatpush1.bf16.xpose.msra.mxu0 0
    %419 = vmatprep.subr.bf16.mxu0 0
    %420 = vmatpush1.bf16.xpose.msra.mxu0 0
    %421 = vmatprep.subr.bf16.mxu0 0
    %422 = vmatpush1.bf16.xpose.msra.mxu0 0
    %423 = vmatprep.subr.bf16.mxu0 0
    %424 = vmatpush1.bf16.xpose.msra.mxu0 0
    %425 = vmatprep.mubr.bf16.mxu0 0
    %426 = vmatmul.mubr.bf16.gmra.mrb[0].mxu0 %v388
    %v427 = vpop.f32.mrb[0].mxu0
    %v428 = vadd.f32 %v182, %v427
    %v429 = vpop.f32.mrb[0].mxu0
    %v430 = vpop.f32.mrb[0].mxu0
    %v431 = vpop.f32.mrb[0].mxu0
    %432 = vdwg.mxu0
    %v433 = vunpack.c.l.b16 %v173
    %v434 = vpack.c.b16 %v433, %v433
    %435 = vrot.lane.b32.xlu0 %v434, 96
    %v436 = vpop.permute.xlu0 %435
    %v438 = vsel %vm188, %v173, 0
    %v441 = vsel %vm188, %v436, 0
    %443 = vmatprep.subr.bf16.mxu0 0
    %444 = vmatpush1.bf16.xpose.msra.mxu0 %v441
    %445 = vmatprep.subr.bf16.mxu0 0
    %446 = vmatpush1.bf16.xpose.msra.mxu0 0
    %447 = vmatprep.subr.bf16.mxu0 0
    %448 = vmatpush1.bf16.xpose.msra.mxu0 0
    %449 = vmatprep.subr.bf16.mxu0 0
    %450 = vmatpush1.bf16.xpose.msra.mxu0 0
    %451 = vmatprep.subr.bf16.mxu0 0
    %452 = vmatpush1.bf16.xpose.msra.mxu0 0
    %453 = vmatprep.subr.bf16.mxu0 0
    %454 = vmatpush1.bf16.xpose.msra.mxu0 0
    %455 = vmatprep.subr.bf16.mxu0 0
    %456 = vmatpush1.bf16.xpose.msra.mxu0 0
    %457 = vmatprep.subr.bf16.mxu0 0
    %458 = vmatpush1.bf16.xpose.msra.mxu0 0
    %459 = vmatprep.subr.bf16.mxu0 0
    %460 = vmatpush1.bf16.xpose.msra.mxu0 0
    %461 = vmatprep.subr.bf16.mxu0 0
    %462 = vmatpush1.bf16.xpose.msra.mxu0 0
    %463 = vmatprep.subr.bf16.mxu0 0
    %464 = vmatpush1.bf16.xpose.msra.mxu0 0
    %465 = vmatprep.subr.bf16.mxu0 0
    %466 = vmatpush1.bf16.xpose.msra.mxu0 0
    %467 = vmatprep.subr.bf16.mxu0 0
    %468 = vmatpush1.bf16.xpose.msra.mxu0 0
    %469 = vmatprep.subr.bf16.mxu0 0
    %470 = vmatpush1.bf16.xpose.msra.mxu0 0
    %471 = vmatprep.subr.bf16.mxu0 0
    %472 = vmatpush1.bf16.xpose.msra.mxu0 0
    %473 = vmatprep.subr.bf16.mxu0 0
    %474 = vmatpush1.bf16.xpose.msra.mxu0 0
    %475 = vmatprep.mubr.bf16.mxu0 0
    %476 = vmatmul.mubr.bf16.gmra.mrb[0].mxu0 %v438
    %v477 = vpop.f32.mrb[0].mxu0
    %v478 = vadd.f32 %v183, %v477
    %v479 = vpop.f32.mrb[0].mxu0
    %v480 = vpop.f32.mrb[0].mxu0
    %v481 = vpop.f32.mrb[0].mxu0
    %482 = vdwg.mxu0
    %v483 = vunpack.c.l.b16 %v175
    %v484 = vpack.c.b16 %v483, %v483
    %485 = vrot.lane.b32.xlu0 %v484, 96
    %v486 = vpop.permute.xlu0 %485
    %v488 = vsel %vm188, %v175, 0
    %v491 = vsel %vm188, %v486, 0
    %493 = vmatprep.subr.bf16.mxu0 0
    %494 = vmatpush1.bf16.xpose.msra.mxu0 %v491
    %495 = vmatprep.subr.bf16.mxu0 0
    %496 = vmatpush1.bf16.xpose.msra.mxu0 0
    %497 = vmatprep.subr.bf16.mxu0 0
    %498 = vmatpush1.bf16.xpose.msra.mxu0 0
    %499 = vmatprep.subr.bf16.mxu0 0
    %500 = vmatpush1.bf16.xpose.msra.mxu0 0
    %501 = vmatprep.subr.bf16.mxu0 0
    %502 = vmatpush1.bf16.xpose.msra.mxu0 0
    %503 = vmatprep.subr.bf16.mxu0 0
    %504 = vmatpush1.bf16.xpose.msra.mxu0 0
    %505 = vmatprep.subr.bf16.mxu0 0
    %506 = vmatpush1.bf16.xpose.msra.mxu0 0
    %507 = vmatprep.subr.bf16.mxu0 0
    %508 = vmatpush1.bf16.xpose.msra.mxu0 0
    %509 = vmatprep.subr.bf16.mxu0 0
    %510 = vmatpush1.bf16.xpose.msra.mxu0 0
    %511 = vmatprep.subr.bf16.mxu0 0
    %512 = vmatpush1.bf16.xpose.msra.mxu0 0
    %513 = vmatprep.subr.bf16.mxu0 0
    %514 = vmatpush1.bf16.xpose.msra.mxu0 0
    %515 = vmatprep.subr.bf16.mxu0 0
    %516 = vmatpush1.bf16.xpose.msra.mxu0 0
    %517 = vmatprep.subr.bf16.mxu0 0
    %518 = vmatpush1.bf16.xpose.msra.mxu0 0
    %519 = vmatprep.subr.bf16.mxu0 0
    %520 = vmatpush1.bf16.xpose.msra.mxu0 0
    %521 = vmatprep.subr.bf16.mxu0 0
    %522 = vmatpush1.bf16.xpose.msra.mxu0 0
    %523 = vmatprep.subr.bf16.mxu0 0
    %524 = vmatpush1.bf16.xpose.msra.mxu0 0
    %525 = vmatprep.mubr.bf16.mxu0 0
    %526 = vmatmul.mubr.bf16.gmra.mrb[0].mxu0 %v488
    %v527 = vpop.f32.mrb[0].mxu0
    %v528 = vadd.f32 %v184, %v527
    %v529 = vpop.f32.mrb[0].mxu0
    %v530 = vpop.f32.mrb[0].mxu0
    %v531 = vpop.f32.mrb[0].mxu0
    %532 = vdwg.mxu0
    %v533 = vunpack.c.l.b16 %v177
    %v534 = vpack.c.b16 %v533, %v533
    %535 = vrot.lane.b32.xlu0 %v534, 96
    %v536 = vpop.permute.xlu0 %535
    %v538 = vsel %vm188, %v177, 0
    %v541 = vsel %vm188, %v536, 0
    %543 = vmatprep.subr.bf16.mxu0 0
    %544 = vmatpush1.bf16.xpose.msra.mxu0 %v541
    %545 = vmatprep.subr.bf16.mxu0 0
    %546 = vmatpush1.bf16.xpose.msra.mxu0 0
    %547 = vmatprep.subr.bf16.mxu0 0
    %548 = vmatpush1.bf16.xpose.msra.mxu0 0
    %549 = vmatprep.subr.bf16.mxu0 0
    %550 = vmatpush1.bf16.xpose.msra.mxu0 0
    %551 = vmatprep.subr.bf16.mxu0 0
    %552 = vmatpush1.bf16.xpose.msra.mxu0 0
    %553 = vmatprep.subr.bf16.mxu0 0
    %554 = vmatpush1.bf16.xpose.msra.mxu0 0
    %555 = vmatprep.subr.bf16.mxu0 0
    %556 = vmatpush1.bf16.xpose.msra.mxu0 0
    %557 = vmatprep.subr.bf16.mxu0 0
    %558 = vmatpush1.bf16.xpose.msra.mxu0 0
    %559 = vmatprep.subr.bf16.mxu0 0
    %560 = vmatpush1.bf16.xpose.msra.mxu0 0
    %561 = vmatprep.subr.bf16.mxu0 0
    %562 = vmatpush1.bf16.xpose.msra.mxu0 0
    %563 = vmatprep.subr.bf16.mxu0 0
    %564 = vmatpush1.bf16.xpose.msra.mxu0 0
    %565 = vmatprep.subr.bf16.mxu0 0
    %566 = vmatpush1.bf16.xpose.msra.mxu0 0
    %567 = vmatprep.subr.bf16.mxu0 0
    %568 = vmatpush1.bf16.xpose.msra.mxu0 0
    %569 = vmatprep.subr.bf16.mxu0 0
    %570 = vmatpush1.bf16.xpose.msra.mxu0 0
    %571 = vmatprep.subr.bf16.mxu0 0
    %572 = vmatpush1.bf16.xpose.msra.mxu0 0
    %573 = vmatprep.subr.bf16.mxu0 0
    %574 = vmatpush1.bf16.xpose.msra.mxu0 0
    %575 = vmatprep.mubr.bf16.mxu0 0
    %576 = vmatmul.mubr.bf16.gmra.mrb[0].mxu0 %v538
    %v577 = vpop.f32.mrb[0].mxu0
    %v578 = vadd.f32 %v185, %v577
    %v579 = vpop.f32.mrb[0].mxu0
    %v580 = vpop.f32.mrb[0].mxu0
    %v581 = vpop.f32.mrb[0].mxu0
    %582 = vdwg.mxu0
    %v583 = vsel %vm188, %v230, -inf
    %584 = vmax.xlane.f32.xlu0 %v583
    %v585 = vpop.xlane.xlu0 %584
    %v586 = vsel %vm188, %v278, -inf
    %587 = vmax.xlane.f32.xlu0 %v586
    %v588 = vpop.xlane.xlu0 %587
    %v589 = vsel %vm188, %v328, -inf
    %590 = vmax.xlane.f32.xlu0 %v589
    %v591 = vpop.xlane.xlu0 %590
    %v592 = vsel %vm188, %v378, -inf
    %593 = vmax.xlane.f32.xlu0 %v592
    %v594 = vpop.xlane.xlu0 %593
    %v595 = vsel %vm188, %v428, -inf
    %596 = vmax.xlane.f32.xlu0 %v595
    %v597 = vpop.xlane.xlu0 %596
    %v598 = vsel %vm188, %v478, -inf
    %599 = vmax.xlane.f32.xlu0 %v598
    %v600 = vpop.xlane.xlu0 %599
    %v601 = vsel %vm188, %v528, -inf
    %602 = vmax.xlane.f32.xlu0 %v601
    %v603 = vpop.xlane.xlu0 %602
    %v604 = vsel %vm188, %v578, -inf
    %605 = vmax.xlane.f32.xlu0 %v604
    %v606 = vpop.xlane.xlu0 %605
    %v607 = vsub.f32 %v230, %v585
    %v608 = vsub.f32 %v278, %v588
    %v609 = vsub.f32 %v328, %v591
    %v610 = vsub.f32 %v378, %v594
    %v611 = vsub.f32 %v428, %v597
    %v612 = vsub.f32 %v478, %v600
    %v613 = vsub.f32 %v528, %v603
    %v614 = vsub.f32 %v578, %v606
    %v615 = vmul.f32 %v607, 1.442695
    %v616 = vpow.pop %v615
    %v617 = vmul.f32 %v608, 1.442695
    %v618 = vpow.pop %v617
    %v619 = vmul.f32 %v609, 1.442695
    %v620 = vpow.pop %v619
    %v621 = vmul.f32 %v610, 1.442695
    %v622 = vpow.pop %v621
    %v623 = vmul.f32 %v611, 1.442695
    %v624 = vpow.pop %v623
    %v625 = vmul.f32 %v612, 1.442695
    %v626 = vpow.pop %v625
    %v627 = vmul.f32 %v613, 1.442695
    %v628 = vpow.pop %v627
    %v629 = vmul.f32 %v614, 1.442695
    %v630 = vpow.pop %v629
    %v631 = vsel %vm188, %v616, 0.0
    %632 = vadd.xlane.f32.xlu0 %v631
    %v633 = vpop.xlane.xlu0 %632
    %v634 = vsel %vm188, %v618, 0.0
    %635 = vadd.xlane.f32.xlu0 %v634
    %v636 = vpop.xlane.xlu0 %635
    %v637 = vsel %vm188, %v620, 0.0
    %638 = vadd.xlane.f32.xlu0 %v637
    %v639 = vpop.xlane.xlu0 %638
    %v640 = vsel %vm188, %v622, 0.0
    %641 = vadd.xlane.f32.xlu0 %v640
    %v642 = vpop.xlane.xlu0 %641
    %v643 = vsel %vm188, %v624, 0.0
    %644 = vadd.xlane.f32.xlu0 %v643
    %v645 = vpop.xlane.xlu0 %644
    %v646 = vsel %vm188, %v626, 0.0
    %647 = vadd.xlane.f32.xlu0 %v646
    %v648 = vpop.xlane.xlu0 %647
    %v649 = vsel %vm188, %v628, 0.0
    %650 = vadd.xlane.f32.xlu0 %v649
    %v651 = vpop.xlane.xlu0 %650
    %v652 = vsel %vm188, %v630, 0.0
    %653 = vadd.xlane.f32.xlu0 %v652
    %v654 = vpop.xlane.xlu0 %653
    %v655 = vrcp.pop %v633
    %v656 = vrcp.pop %v636
    %v657 = vrcp.pop %v639
    %v658 = vrcp.pop %v642
    %v659 = vrcp.pop %v645
    %v660 = vrcp.pop %v648
    %v661 = vrcp.pop %v651
    %v662 = vrcp.pop %v654
    %v663 = vmul.f32 %v616, %v655
    %v664 = vmul.f32 %v618, %v656
    %v665 = vmul.f32 %v620, %v657
    %v666 = vmul.f32 %v622, %v658
    %v667 = vmul.f32 %v624, %v659
    %v668 = vmul.f32 %v626, %v660
    %v669 = vmul.f32 %v628, %v661
    %v670 = vmul.f32 %v630, %v662
    %v671 = vpack.c.bf16 %v663, %v663
    %v672 = vpack.c.bf16 %v664, %v664
    %v673 = vpack.c.bf16 %v665, %v665
    %v674 = vpack.c.bf16 %v666, %v666
    %v675 = vpack.c.bf16 %v667, %v667
    %v676 = vpack.c.bf16 %v668, %v668
    %v677 = vpack.c.bf16 %v669, %v669
    %v678 = vpack.c.bf16 %v670, %v670
    %679 = vrot.lane.b32.xlu0 %v164, 64
    %v680 = vpop.permute.xlu0 %679
    %v682 = vsel %vm188, %v671, 0
    %vm684 = vcmask 1043456
    %v686 = vsel %vm684, %v680, 0
    %688 = vmatprep.subr.bf16.mxu0 0
    %689 = vmatpush1.bf16.msra.mxu0 %v686
    %690 = vmatprep.subr.bf16.mxu0 0
    %691 = vmatpush1.bf16.msra.mxu0 0
    %692 = vmatprep.subr.bf16.mxu0 0
    %693 = vmatpush1.bf16.msra.mxu0 0
    %694 = vmatprep.subr.bf16.mxu0 0
    %695 = vmatpush1.bf16.msra.mxu0 0
    %696 = vmatprep.subr.bf16.mxu0 0
    %697 = vmatpush1.bf16.msra.mxu0 0
    %698 = vmatprep.subr.bf16.mxu0 0
    %699 = vmatpush1.bf16.msra.mxu0 0
    %700 = vmatprep.subr.bf16.mxu0 0
    %701 = vmatpush1.bf16.msra.mxu0 0
    %702 = vmatprep.subr.bf16.mxu0 0
    %703 = vmatpush1.bf16.msra.mxu0 0
    %704 = vmatprep.subr.bf16.mxu0 0
    %705 = vmatpush1.bf16.msra.mxu0 0
    %706 = vmatprep.subr.bf16.mxu0 0
    %707 = vmatpush1.bf16.msra.mxu0 0
    %708 = vmatprep.subr.bf16.mxu0 0
    %709 = vmatpush1.bf16.msra.mxu0 0
    %710 = vmatprep.subr.bf16.mxu0 0
    %711 = vmatpush1.bf16.msra.mxu0 0
    %712 = vmatprep.subr.bf16.mxu0 0
    %713 = vmatpush1.bf16.msra.mxu0 0
    %714 = vmatprep.subr.bf16.mxu0 0
    %715 = vmatpush1.bf16.msra.mxu0 0
    %716 = vmatprep.subr.bf16.mxu0 0
    %717 = vmatpush1.bf16.msra.mxu0 0
    %718 = vmatprep.subr.bf16.mxu0 0
    %719 = vmatpush1.bf16.msra.mxu0 0
    %720 = vmatprep.mubr.bf16.mxu0 0
    %721 = vmatmul.mubr.bf16.gmra.mrb[0].mxu0 %v682
    %v722 = vpop.f32.mrb[0].mxu0
    %v723 = vadd.f32 0.0, %v722
    %v724 = vpop.f32.mrb[0].mxu0
    %v725 = vpop.f32.mrb[0].mxu0
    %v726 = vpop.f32.mrb[0].mxu0
    %727 = vdwg.mxu0
    %728 = vrot.lane.b32.xlu0 %v165, 64
    %v729 = vpop.permute.xlu0 %728
    %v731 = vsel %vm188, %v672, 0
    %v734 = vsel %vm684, %v729, 0
    %736 = vmatprep.subr.bf16.mxu0 0
    %737 = vmatpush1.bf16.msra.mxu0 %v734
    %738 = vmatprep.subr.bf16.mxu0 0
    %739 = vmatpush1.bf16.msra.mxu0 0
    %740 = vmatprep.subr.bf16.mxu0 0
    %741 = vmatpush1.bf16.msra.mxu0 0
    %742 = vmatprep.subr.bf16.mxu0 0
    %743 = vmatpush1.bf16.msra.mxu0 0
    %744 = vmatprep.subr.bf16.mxu0 0
    %745 = vmatpush1.bf16.msra.mxu0 0
    %746 = vmatprep.subr.bf16.mxu0 0
    %747 = vmatpush1.bf16.msra.mxu0 0
    %748 = vmatprep.subr.bf16.mxu0 0
    %749 = vmatpush1.bf16.msra.mxu0 0
    %750 = vmatprep.subr.bf16.mxu0 0
    %751 = vmatpush1.bf16.msra.mxu0 0
    %752 = vmatprep.subr.bf16.mxu0 0
    %753 = vmatpush1.bf16.msra.mxu0 0
    %754 = vmatprep.subr.bf16.mxu0 0
    %755 = vmatpush1.bf16.msra.mxu0 0
    %756 = vmatprep.subr.bf16.mxu0 0
    %757 = vmatpush1.bf16.msra.mxu0 0
    %758 = vmatprep.subr.bf16.mxu0 0
    %759 = vmatpush1.bf16.msra.mxu0 0
    %760 = vmatprep.subr.bf16.mxu0 0
    %761 = vmatpush1.bf16.msra.mxu0 0
    %762 = vmatprep.subr.bf16.mxu0 0
    %763 = vmatpush1.bf16.msra.mxu0 0
    %764 = vmatprep.subr.bf16.mxu0 0
    %765 = vmatpush1.bf16.msra.mxu0 0
    %766 = vmatprep.subr.bf16.mxu0 0
    %767 = vmatpush1.bf16.msra.mxu0 0
    %768 = vmatprep.mubr.bf16.mxu0 0
    %769 = vmatmul.mubr.bf16.gmra.mrb[0].mxu0 %v731
    %v770 = vpop.f32.mrb[0].mxu0
    %v771 = vadd.f32 0.0, %v770
    %v772 = vpop.f32.mrb[0].mxu0
    %v773 = vpop.f32.mrb[0].mxu0
    %v774 = vpop.f32.mrb[0].mxu0
    %775 = vdwg.mxu0
    %776 = vrot.lane.b32.xlu0 %v284, 64
    %v777 = vpop.permute.xlu0 %776
    %v779 = vsel %vm188, %v673, 0
    %v782 = vsel %vm684, %v777, 0
    %784 = vmatprep.subr.bf16.mxu0 0
    %785 = vmatpush1.bf16.msra.mxu0 %v782
    %786 = vmatprep.subr.bf16.mxu0 0
    %787 = vmatpush1.bf16.msra.mxu0 0
    %788 = vmatprep.subr.bf16.mxu0 0
    %789 = vmatpush1.bf16.msra.mxu0 0
    %790 = vmatprep.subr.bf16.mxu0 0
    %791 = vmatpush1.bf16.msra.mxu0 0
    %792 = vmatprep.subr.bf16.mxu0 0
    %793 = vmatpush1.bf16.msra.mxu0 0
    %794 = vmatprep.subr.bf16.mxu0 0
    %795 = vmatpush1.bf16.msra.mxu0 0
    %796 = vmatprep.subr.bf16.mxu0 0
    %797 = vmatpush1.bf16.msra.mxu0 0
    %798 = vmatprep.subr.bf16.mxu0 0
    %799 = vmatpush1.bf16.msra.mxu0 0
    %800 = vmatprep.subr.bf16.mxu0 0
    %801 = vmatpush1.bf16.msra.mxu0 0
    %802 = vmatprep.subr.bf16.mxu0 0
    %803 = vmatpush1.bf16.msra.mxu0 0
    %804 = vmatprep.subr.bf16.mxu0 0
    %805 = vmatpush1.bf16.msra.mxu0 0
    %806 = vmatprep.subr.bf16.mxu0 0
    %807 = vmatpush1.bf16.msra.mxu0 0
    %808 = vmatprep.subr.bf16.mxu0 0
    %809 = vmatpush1.bf16.msra.mxu0 0
    %810 = vmatprep.subr.bf16.mxu0 0
    %811 = vmatpush1.bf16.msra.mxu0 0
    %812 = vmatprep.subr.bf16.mxu0 0
    %813 = vmatpush1.bf16.msra.mxu0 0
    %814 = vmatprep.subr.bf16.mxu0 0
    %815 = vmatpush1.bf16.msra.mxu0 0
    %816 = vmatprep.mubr.bf16.mxu0 0
    %817 = vmatmul.mubr.bf16.gmra.mrb[0].mxu0 %v779
    %v818 = vpop.f32.mrb[0].mxu0
    %v819 = vadd.f32 0.0, %v818
    %v820 = vpop.f32.mrb[0].mxu0
    %v821 = vpop.f32.mrb[0].mxu0
    %v822 = vpop.f32.mrb[0].mxu0
    %823 = vdwg.mxu0
    %824 = vrot.lane.b32.xlu0 %v334, 64
    %v825 = vpop.permute.xlu0 %824
    %v827 = vsel %vm188, %v674, 0
    %v830 = vsel %vm684, %v825, 0
    %832 = vmatprep.subr.bf16.mxu0 0
    %833 = vmatpush1.bf16.msra.mxu0 %v830
    %834 = vmatprep.subr.bf16.mxu0 0
    %835 = vmatpush1.bf16.msra.mxu0 0
    %836 = vmatprep.subr.bf16.mxu0 0
    %837 = vmatpush1.bf16.msra.mxu0 0
    %838 = vmatprep.subr.bf16.mxu0 0
    %839 = vmatpush1.bf16.msra.mxu0 0
    %840 = vmatprep.subr.bf16.mxu0 0
    %841 = vmatpush1.bf16.msra.mxu0 0
    %842 = vmatprep.subr.bf16.mxu0 0
    %843 = vmatpush1.bf16.msra.mxu0 0
    %844 = vmatprep.subr.bf16.mxu0 0
    %845 = vmatpush1.bf16.msra.mxu0 0
    %846 = vmatprep.subr.bf16.mxu0 0
    %847 = vmatpush1.bf16.msra.mxu0 0
    %848 = vmatprep.subr.bf16.mxu0 0
    %849 = vmatpush1.bf16.msra.mxu0 0
    %850 = vmatprep.subr.bf16.mxu0 0
    %851 = vmatpush1.bf16.msra.mxu0 0
    %852 = vmatprep.subr.bf16.mxu0 0
    %853 = vmatpush1.bf16.msra.mxu0 0
    %854 = vmatprep.subr.bf16.mxu0 0
    %855 = vmatpush1.bf16.msra.mxu0 0
    %856 = vmatprep.subr.bf16.mxu0 0
    %857 = vmatpush1.bf16.msra.mxu0 0
    %858 = vmatprep.subr.bf16.mxu0 0
    %859 = vmatpush1.bf16.msra.mxu0 0
    %860 = vmatprep.subr.bf16.mxu0 0
    %861 = vmatpush1.bf16.msra.mxu0 0
    %862 = vmatprep.subr.bf16.mxu0 0
    %863 = vmatpush1.bf16.msra.mxu0 0
    %864 = vmatprep.mubr.bf16.mxu0 0
    %865 = vmatmul.mubr.bf16.gmra.mrb[0].mxu0 %v827
    %v866 = vpop.f32.mrb[0].mxu0
    %v867 = vadd.f32 0.0, %v866
    %v868 = vpop.f32.mrb[0].mxu0
    %v869 = vpop.f32.mrb[0].mxu0
    %v870 = vpop.f32.mrb[0].mxu0
    %871 = vdwg.mxu0
    %872 = vrot.lane.b32.xlu0 %v384, 64
    %v873 = vpop.permute.xlu0 %872
    %v875 = vsel %vm188, %v675, 0
    %v878 = vsel %vm684, %v873, 0
    %880 = vmatprep.subr.bf16.mxu0 0
    %881 = vmatpush1.bf16.msra.mxu0 %v878
    %882 = vmatprep.subr.bf16.mxu0 0
    %883 = vmatpush1.bf16.msra.mxu0 0
    %884 = vmatprep.subr.bf16.mxu0 0
    %885 = vmatpush1.bf16.msra.mxu0 0
    %886 = vmatprep.subr.bf16.mxu0 0
    %887 = vmatpush1.bf16.msra.mxu0 0
    %888 = vmatprep.subr.bf16.mxu0 0
    %889 = vmatpush1.bf16.msra.mxu0 0
    %890 = vmatprep.subr.bf16.mxu0 0
    %891 = vmatpush1.bf16.msra.mxu0 0
    %892 = vmatprep.subr.bf16.mxu0 0
    %893 = vmatpush1.bf16.msra.mxu0 0
    %894 = vmatprep.subr.bf16.mxu0 0
    %895 = vmatpush1.bf16.msra.mxu0 0
    %896 = vmatprep.subr.bf16.mxu0 0
    %897 = vmatpush1.bf16.msra.mxu0 0
    %898 = vmatprep.subr.bf16.mxu0 0
    %899 = vmatpush1.bf16.msra.mxu0 0
    %900 = vmatprep.subr.bf16.mxu0 0
    %901 = vmatpush1.bf16.msra.mxu0 0
    %902 = vmatprep.subr.bf16.mxu0 0
    %903 = vmatpush1.bf16.msra.mxu0 0
    %904 = vmatprep.subr.bf16.mxu0 0
    %905 = vmatpush1.bf16.msra.mxu0 0
    %906 = vmatprep.subr.bf16.mxu0 0
    %907 = vmatpush1.bf16.msra.mxu0 0
    %908 = vmatprep.subr.bf16.mxu0 0
    %909 = vmatpush1.bf16.msra.mxu0 0
    %910 = vmatprep.subr.bf16.mxu0 0
    %911 = vmatpush1.bf16.msra.mxu0 0
    %912 = vmatprep.mubr.bf16.mxu0 0
    %913 = vmatmul.mubr.bf16.gmra.mrb[0].mxu0 %v875
    %v914 = vpop.f32.mrb[0].mxu0
    %v915 = vadd.f32 0.0, %v914
    %v916 = vpop.f32.mrb[0].mxu0
    %v917 = vpop.f32.mrb[0].mxu0
    %v918 = vpop.f32.mrb[0].mxu0
    %919 = vdwg.mxu0
    %920 = vrot.lane.b32.xlu0 %v434, 64
    %v921 = vpop.permute.xlu0 %920
    %v923 = vsel %vm188, %v676, 0
    %v926 = vsel %vm684, %v921, 0
    %928 = vmatprep.subr.bf16.mxu0 0
    %929 = vmatpush1.bf16.msra.mxu0 %v926
    %930 = vmatprep.subr.bf16.mxu0 0
    %931 = vmatpush1.bf16.msra.mxu0 0
    %932 = vmatprep.subr.bf16.mxu0 0
    %933 = vmatpush1.bf16.msra.mxu0 0
    %934 = vmatprep.subr.bf16.mxu0 0
    %935 = vmatpush1.bf16.msra.mxu0 0
    %936 = vmatprep.subr.bf16.mxu0 0
    %937 = vmatpush1.bf16.msra.mxu0 0
    %938 = vmatprep.subr.bf16.mxu0 0
    %939 = vmatpush1.bf16.msra.mxu0 0
    %940 = vmatprep.subr.bf16.mxu0 0
    %941 = vmatpush1.bf16.msra.mxu0 0
    %942 = vmatprep.subr.bf16.mxu0 0
    %943 = vmatpush1.bf16.msra.mxu0 0
    %944 = vmatprep.subr.bf16.mxu0 0
    %945 = vmatpush1.bf16.msra.mxu0 0
    %946 = vmatprep.subr.bf16.mxu0 0
    %947 = vmatpush1.bf16.msra.mxu0 0
    %948 = vmatprep.subr.bf16.mxu0 0
    %949 = vmatpush1.bf16.msra.mxu0 0
    %950 = vmatprep.subr.bf16.mxu0 0
    %951 = vmatpush1.bf16.msra.mxu0 0
    %952 = vmatprep.subr.bf16.mxu0 0
    %953 = vmatpush1.bf16.msra.mxu0 0
    %954 = vmatprep.subr.bf16.mxu0 0
    %955 = vmatpush1.bf16.msra.mxu0 0
    %956 = vmatprep.subr.bf16.mxu0 0
    %957 = vmatpush1.bf16.msra.mxu0 0
    %958 = vmatprep.subr.bf16.mxu0 0
    %959 = vmatpush1.bf16.msra.mxu0 0
    %960 = vmatprep.mubr.bf16.mxu0 0
    %961 = vmatmul.mubr.bf16.gmra.mrb[0].mxu0 %v923
    %v962 = vpop.f32.mrb[0].mxu0
    %v963 = vadd.f32 0.0, %v962
    %v964 = vpop.f32.mrb[0].mxu0
    %v965 = vpop.f32.mrb[0].mxu0
    %v966 = vpop.f32.mrb[0].mxu0
    %967 = vdwg.mxu0
    %968 = vrot.lane.b32.xlu0 %v484, 64
    %v969 = vpop.permute.xlu0 %968
    %v971 = vsel %vm188, %v677, 0
    %v974 = vsel %vm684, %v969, 0
    %976 = vmatprep.subr.bf16.mxu0 0
    %977 = vmatpush1.bf16.msra.mxu0 %v974
    %978 = vmatprep.subr.bf16.mxu0 0
    %979 = vmatpush1.bf16.msra.mxu0 0
    %980 = vmatprep.subr.bf16.mxu0 0
    %981 = vmatpush1.bf16.msra.mxu0 0
    %982 = vmatprep.subr.bf16.mxu0 0
    %983 = vmatpush1.bf16.msra.mxu0 0
    %984 = vmatprep.subr.bf16.mxu0 0
    %985 = vmatpush1.bf16.msra.mxu0 0
    %986 = vmatprep.subr.bf16.mxu0 0
    %987 = vmatpush1.bf16.msra.mxu0 0
    %988 = vmatprep.subr.bf16.mxu0 0
    %989 = vmatpush1.bf16.msra.mxu0 0
    %990 = vmatprep.subr.bf16.mxu0 0
    %991 = vmatpush1.bf16.msra.mxu0 0
    %992 = vmatprep.subr.bf16.mxu0 0
    %993 = vmatpush1.bf16.msra.mxu0 0
    %994 = vmatprep.subr.bf16.mxu0 0
    %995 = vmatpush1.bf16.msra.mxu0 0
    %996 = vmatprep.subr.bf16.mxu0 0
    %997 = vmatpush1.bf16.msra.mxu0 0
    %998 = vmatprep.subr.bf16.mxu0 0
    %999 = vmatpush1.bf16.msra.mxu0 0
    %1000 = vmatprep.subr.bf16.mxu0 0
    %1001 = vmatpush1.bf16.msra.mxu0 0
    %1002 = vmatprep.subr.bf16.mxu0 0
    %1003 = vmatpush1.bf16.msra.mxu0 0
    %1004 = vmatprep.subr.bf16.mxu0 0
    %1005 = vmatpush1.bf16.msra.mxu0 0
    %1006 = vmatprep.subr.bf16.mxu0 0
    %1007 = vmatpush1.bf16.msra.mxu0 0
    %1008 = vmatprep.mubr.bf16.mxu0 0
    %1009 = vmatmul.mubr.bf16.gmra.mrb[0].mxu0 %v971
    %v1010 = vpop.f32.mrb[0].mxu0
    %v1011 = vadd.f32 0.0, %v1010
    %v1012 = vpop.f32.mrb[0].mxu0
    %v1013 = vpop.f32.mrb[0].mxu0
    %v1014 = vpop.f32.mrb[0].mxu0
    %1015 = vdwg.mxu0
    %1016 = vrot.lane.b32.xlu0 %v534, 64
    %v1017 = vpop.permute.xlu0 %1016
    %v1019 = vsel %vm188, %v678, 0
    %v1022 = vsel %vm684, %v1017, 0
    %1024 = vmatprep.subr.bf16.mxu0 0
    %1025 = vmatpush1.bf16.msra.mxu0 %v1022
    %1026 = vmatprep.subr.bf16.mxu0 0
    %1027 = vmatpush1.bf16.msra.mxu0 0
    %1028 = vmatprep.subr.bf16.mxu0 0
    %1029 = vmatpush1.bf16.msra.mxu0 0
    %1030 = vmatprep.subr.bf16.mxu0 0
    %1031 = vmatpush1.bf16.msra.mxu0 0
    %1032 = vmatprep.subr.bf16.mxu0 0
    %1033 = vmatpush1.bf16.msra.mxu0 0
    %1034 = vmatprep.subr.bf16.mxu0 0
    %1035 = vmatpush1.bf16.msra.mxu0 0
    %1036 = vmatprep.subr.bf16.mxu0 0
    %1037 = vmatpush1.bf16.msra.mxu0 0
    %1038 = vmatprep.subr.bf16.mxu0 0
    %1039 = vmatpush1.bf16.msra.mxu0 0
    %1040 = vmatprep.subr.bf16.mxu0 0
    %1041 = vmatpush1.bf16.msra.mxu0 0
    %1042 = vmatprep.subr.bf16.mxu0 0
    %1043 = vmatpush1.bf16.msra.mxu0 0
    %1044 = vmatprep.subr.bf16.mxu0 0
    %1045 = vmatpush1.bf16.msra.mxu0 0
    %1046 = vmatprep.subr.bf16.mxu0 0
    %1047 = vmatpush1.bf16.msra.mxu0 0
    %1048 = vmatprep.subr.bf16.mxu0 0
    %1049 = vmatpush1.bf16.msra.mxu0 0
    %1050 = vmatprep.subr.bf16.mxu0 0
    %1051 = vmatpush1.bf16.msra.mxu0 0
    %1052 = vmatprep.subr.bf16.mxu0 0
    %1053 = vmatpush1.bf16.msra.mxu0 0
    %1054 = vmatprep.subr.bf16.mxu0 0
    %1055 = vmatpush1.bf16.msra.mxu0 0
    %1056 = vmatprep.mubr.bf16.mxu0 0
    %1057 = vmatmul.mubr.bf16.gmra.mrb[0].mxu0 %v1019
    %v1058 = vpop.f32.mrb[0].mxu0
    %v1059 = vadd.f32 0.0, %v1058
    %v1060 = vpop.f32.mrb[0].mxu0
    %v1061 = vpop.f32.mrb[0].mxu0
    %v1062 = vpop.f32.mrb[0].mxu0
    %1063 = vdwg.mxu0
    %1066 = vrot.lane.b32.xlu0 %v819, 8
    %v1067 = vpop.permute.xlu0 %1066
    %1068 = vrot.lane.b32.xlu0 %v867, 8
    %v1069 = vpop.permute.xlu0 %1068
    %1074 = vrot.lane.b32.xlu0 %v915, 16
    %v1075 = vpop.permute.xlu0 %1074
    %1076 = vrot.lane.b32.xlu0 %v963, 16
    %v1077 = vpop.permute.xlu0 %1076
    %1082 = vrot.lane.b32.xlu0 %v1011, 24
    %v1083 = vpop.permute.xlu0 %1082
    %1084 = vrot.lane.b32.xlu0 %v1059, 24
    %v1085 = vpop.permute.xlu0 %1084
    %v1088 = vsel %vm188, %v723, %v1067
    %v1089 = vsel %vm188, %v771, %v1069
    %vm1090 = vcmask 130048
    %v1091 = vsel %vm1090, %v1088, %v1075
    %v1092 = vsel %vm1090, %v1089, %v1077
    %vm1093 = vcmask 195584
    %v1094 = vsel %vm1093, %v1091, %v1083
    %v1095 = vsel %vm1093, %v1092, %v1085
    %v1096 = vpack.c.bf16 %v1095, %v1094
    %v1097 = vld [vmem:[#allocation7] sm:$0xf]
    %v1098 = vld [vmem:[#allocation7 + $0x4] sm:$0xf]
    %v1099 = vld [vmem:[#allocation7 + $0x8] sm:$0xf]
    %v1100 = vld [vmem:[#allocation7 + $0xc] sm:$0xf]
    %v1101 = vld [vmem:[%s7] sm:$0x1]
    %v1102 = vlaneseq
    %v1103 = vshrl.u32 %v1102, 7
    %v1104 = vsub.s32 0, %v1103
    %v1105 = vrot.slane %v1101, %v1104
    %v1110 = vunpack.c.l.b16 %v1097
    %v1111 = vunpack.c.l.b16 %v1098
    %v1112 = vunpack.c.l.b16 %v1099
    %v1113 = vunpack.c.l.b16 %v1100
    %v1114 = vpack.c.b16 %v1111, %v1110
    %v1115 = vpack.c.b16 %v1113, %v1112
    %v1119 = vsel %vm115, %v1096, 0
    %1121 = vmatprep.subr.bf16.mxu0 0
    %1122 = vmatpush1.bf16.msra.mxu0 %v1114
    %1123 = vmatprep.subr.bf16.mxu0 0
    %1124 = vmatpush1.bf16.msra.mxu0 %v1115
    %1125 = vmatprep.subr.bf16.mxu0 0
    %1126 = vmatpush1.bf16.msra.mxu0 0
    %1127 = vmatprep.subr.bf16.mxu0 0
    %1128 = vmatpush1.bf16.msra.mxu0 0
    %1129 = vmatprep.subr.bf16.mxu0 0
    %1130 = vmatpush1.bf16.msra.mxu0 0
    %1131 = vmatprep.subr.bf16.mxu0 0
    %1132 = vmatpush1.bf16.msra.mxu0 0
    %1133 = vmatprep.subr.bf16.mxu0 0
    %1134 = vmatpush1.bf16.msra.mxu0 0
    %1135 = vmatprep.subr.bf16.mxu0 0
    %1136 = vmatpush1.bf16.msra.mxu0 0
    %1137 = vmatprep.subr.bf16.mxu0 0
    %1138 = vmatpush1.bf16.msra.mxu0 0
    %1139 = vmatprep.subr.bf16.mxu0 0
    %1140 = vmatpush1.bf16.msra.mxu0 0
    %1141 = vmatprep.subr.bf16.mxu0 0
    %1142 = vmatpush1.bf16.msra.mxu0 0
    %1143 = vmatprep.subr.bf16.mxu0 0
    %1144 = vmatpush1.bf16.msra.mxu0 0
    %1145 = vmatprep.subr.bf16.mxu0 0
    %1146 = vmatpush1.bf16.msra.mxu0 0
    %1147 = vmatprep.subr.bf16.mxu0 0
    %1148 = vmatpush1.bf16.msra.mxu0 0
    %1149 = vmatprep.subr.bf16.mxu0 0
    %1150 = vmatpush1.bf16.msra.mxu0 0
    %1151 = vmatprep.subr.bf16.mxu0 0
    %1152 = vmatpush1.bf16.msra.mxu0 0
    %1153 = vmatprep.mubr.bf16.mxu0 0
    %1154 = vmatmul.mubr.bf16.gmra.mrb[0].mxu0 %v1119
    %v1155 = vpop.f32.mrb[0].mxu0
    %v1156 = vadd.f32 %v1105, %v1155
    %v1157 = vpop.f32.mrb[0].mxu0
    %v1158 = vpop.f32.mrb[0].mxu0
    %v1159 = vadd.f32 %v1105, %v1158
    %v1160 = vpop.f32.mrb[0].mxu0
    %1161 = vdwg.mxu0
    %v1162 = vadd.f32 %v89, %v1156
    %v1163 = vadd.f32 %v90, %v1159
    %v1164 = vld [vmem:[%s7 + $0x1] sm:$0x1]
    %v1165 = vld [vmem:[%s7 + $0x2] sm:$0x1]
    %v1166 = vsel %vm115, %v1162, 0.0
    %1167 = vadd.xlane.f32.xlu0 %v1166
    %v1168 = vpop.xlane.xlu0 %1167
    %v1169 = vsel %vm115, %v1163, 0.0
    %1170 = vadd.xlane.f32.xlu0 %v1169
    %v1171 = vpop.xlane.xlu0 %1170
    %v1172 = vrcp.pop 32.0
    %v1173 = vmul.f32 %v1168, %v1172
    %v1174 = vmul.f32 %v1171, %v1172
    %v1175 = vsub.f32 %v1162, %v1173
    %v1176 = vsub.f32 %v1163, %v1174
    %v1177 = vmul.f32 %v1175, %v1175
    %v1178 = vmul.f32 %v1176, %v1176
    %v1179 = vsel %vm115, %v1177, 0.0
    %1180 = vadd.xlane.f32.xlu0 %v1179
    %v1181 = vpop.xlane.xlu0 %1180
    %v1182 = vsel %vm115, %v1178, 0.0
    %1183 = vadd.xlane.f32.xlu0 %v1182
    %v1184 = vpop.xlane.xlu0 %1183
    %v1185 = vmul.f32 %v1181, %v1172
    %v1186 = vmul.f32 %v1184, %v1172
    %v1187 = vadd.f32 %v1185, 1e-05
    %v1188 = vadd.f32 %v1186, 1e-05
    %v1189 = vrsqrt.pop %v1187
    %v1190 = vrsqrt.pop %v1188
    %v1191 = vmul.f32 %v1175, %v1189
    %v1192 = vmul.f32 %v1176, %v1190
    %v1193 = vlaneseq
    %v1194 = vshrl.u32 %v1193, 7
    %v1195 = vsub.s32 0, %v1194
    %v1196 = vrot.slane %v1164, %v1195
    %v1197 = vmul.f32 %v1191, %v1196
    %v1198 = vmul.f32 %v1192, %v1196
    %v1199 = vlaneseq
    %v1200 = vshrl.u32 %v1199, 7
    %v1201 = vsub.s32 0, %v1200
    %v1202 = vrot.slane %v1165, %v1201
    %v1203 = vadd.f32 %v1197, %v1202
    %v1204 = vadd.f32 %v1198, %v1202
    %v1205 = vpack.c.bf16 %v1204, %v1203
    %v1206 = vld [vmem:[#allocation8] sm:$0xf]
    %v1207 = vld [vmem:[#allocation8 + $0x4] sm:$0xf]
    %v1208 = vld [vmem:[#allocation8 + $0x8] sm:$0xf]
    %v1209 = vld [vmem:[#allocation8 + $0xc] sm:$0xf]
    %v1210 = vld [vmem:[%s5] sm:$0x1]
    %v1212 = vlaneseq
    %v1213 = vshrl.u32 %v1212, 7
    %v1214 = vsub.s32 0, %v1213
    %v1215 = vrot.slane %v1210, %v1214
    %v1221 = vunpack.c.l.b16 %v1206
    %v1222 = vunpack.c.l.b16 %v1207
    %v1223 = vunpack.c.l.b16 %v1208
    %v1224 = vunpack.c.l.b16 %v1209
    %v1225 = vpack.c.b16 %v1222, %v1221
    %v1226 = vpack.c.b16 %v1224, %v1223
    %v1230 = vsel %vm115, %v1205, 0
    %1232 = vmatprep.subr.bf16.mxu0 0
    %1233 = vmatpush1.bf16.msra.mxu0 %v1225
    %1234 = vmatprep.subr.bf16.mxu0 0
    %1235 = vmatpush1.bf16.msra.mxu0 %v1226
    %1236 = vmatprep.subr.bf16.mxu0 0
    %1237 = vmatpush1.bf16.msra.mxu0 0
    %1238 = vmatprep.subr.bf16.mxu0 0
    %1239 = vmatpush1.bf16.msra.mxu0 0
    %1240 = vmatprep.subr.bf16.mxu0 0
    %1241 = vmatpush1.bf16.msra.mxu0 0
    %1242 = vmatprep.subr.bf16.mxu0 0
    %1243 = vmatpush1.bf16.msra.mxu0 0
    %1244 = vmatprep.subr.bf16.mxu0 0
    %1245 = vmatpush1.bf16.msra.mxu0 0
    %1246 = vmatprep.subr.bf16.mxu0 0
    %1247 = vmatpush1.bf16.msra.mxu0 0
    %1248 = vmatprep.subr.bf16.mxu0 0
    %1249 = vmatpush1.bf16.msra.mxu0 0
    %1250 = vmatprep.subr.bf16.mxu0 0
    %1251 = vmatpush1.bf16.msra.mxu0 0
    %1252 = vmatprep.subr.bf16.mxu0 0
    %1253 = vmatpush1.bf16.msra.mxu0 0
    %1254 = vmatprep.subr.bf16.mxu0 0
    %1255 = vmatpush1.bf16.msra.mxu0 0
    %1256 = vmatprep.subr.bf16.mxu0 0
    %1257 = vmatpush1.bf16.msra.mxu0 0
    %1258 = vmatprep.subr.bf16.mxu0 0
    %1259 = vmatpush1.bf16.msra.mxu0 0
    %1260 = vmatprep.subr.bf16.mxu0 0
    %1261 = vmatpush1.bf16.msra.mxu0 0
    %1262 = vmatprep.subr.bf16.mxu0 0
    %1263 = vmatpush1.bf16.msra.mxu0 0
    %1264 = vmatprep.mubr.bf16.mxu0 0
    %1265 = vmatmul.mubr.bf16.gmra.mrb[0].mxu0 %v1230
    %v1266 = vpop.f32.mrb[0].mxu0
    %v1267 = vadd.f32 %v1215, %v1266
    %v1268 = vpop.f32.mrb[0].mxu0
    %v1269 = vpop.f32.mrb[0].mxu0
    %v1270 = vadd.f32 %v1215, %v1269
    %v1271 = vpop.f32.mrb[0].mxu0
    %1272 = vdwg.mxu0
    %v1273 = vmax.f32 %v1267, 0.0
    %v1274 = vmax.f32 %v1270, 0.0
    %v1275 = vpack.c.bf16 %v1274, %v1273
    %v1276 = vld [vmem:[%s6] sm:$0xf]
    %v1277 = vld [vmem:[%s6 + $0x4] sm:$0xf]
    %v1278 = vld [vmem:[%s6 + $0x8] sm:$0xf]
    %v1279 = vld [vmem:[%s6 + $0xc] sm:$0xf]
    %v1280 = vld [vmem:[%s6 + $0x10] sm:$0xf]
    %v1281 = vld [vmem:[%s6 + $0x14] sm:$0xf]
    %v1282 = vld [vmem:[%s6 + $0x18] sm:$0xf]
    %v1283 = vld [vmem:[%s6 + $0x1c] sm:$0xf]
    %v1284 = vld [vmem:[%s7 + $0x3] sm:$0x1]
    %v1285 = vlaneseq
    %v1286 = vshrl.u32 %v1285, 7
    %v1287 = vsub.s32 0, %v1286
    %v1288 = vrot.slane %v1284, %v1287
    %v1297 = vunpack.c.l.b16 %v1276
    %v1298 = vunpack.c.l.b16 %v1277
    %v1299 = vunpack.c.l.b16 %v1278
    %v1300 = vunpack.c.l.b16 %v1279
    %v1301 = vunpack.c.l.b16 %v1280
    %v1302 = vunpack.c.l.b16 %v1281
    %v1303 = vunpack.c.l.b16 %v1282
    %v1304 = vunpack.c.l.b16 %v1283
    %v1305 = vpack.c.b16 %v1298, %v1297
    %v1306 = vpack.c.b16 %v1300, %v1299
    %v1307 = vpack.c.b16 %v1302, %v1301
    %v1308 = vpack.c.b16 %v1304, %v1303
    %vm1313 = vcmask 523264
    %v1315 = vsel %vm1313, %v1275, 0
    %1317 = vmatprep.subr.bf16.mxu0 0
    %1318 = vmatpush1.bf16.msra.mxu0 %v1305
    %1319 = vmatprep.subr.bf16.mxu0 0
    %1320 = vmatpush1.bf16.msra.mxu0 %v1306
    %1321 = vmatprep.subr.bf16.mxu0 0
    %1322 = vmatpush1.bf16.msra.mxu0 %v1307
    %1323 = vmatprep.subr.bf16.mxu0 0
    %1324 = vmatpush1.bf16.msra.mxu0 %v1308
    %1325 = vmatprep.subr.bf16.mxu0 0
    %1326 = vmatpush1.bf16.msra.mxu0 0
    %1327 = vmatprep.subr.bf16.mxu0 0
    %1328 = vmatpush1.bf16.msra.mxu0 0
    %1329 = vmatprep.subr.bf16.mxu0 0
    %1330 = vmatpush1.bf16.msra.mxu0 0
    %1331 = vmatprep.subr.bf16.mxu0 0
    %1332 = vmatpush1.bf16.msra.mxu0 0
    %1333 = vmatprep.subr.bf16.mxu0 0
    %1334 = vmatpush1.bf16.msra.mxu0 0
    %1335 = vmatprep.subr.bf16.mxu0 0
    %1336 = vmatpush1.bf16.msra.mxu0 0
    %1337 = vmatprep.subr.bf16.mxu0 0
    %1338 = vmatpush1.bf16.msra.mxu0 0
    %1339 = vmatprep.subr.bf16.mxu0 0
    %1340 = vmatpush1.bf16.msra.mxu0 0
    %1341 = vmatprep.subr.bf16.mxu0 0
    %1342 = vmatpush1.bf16.msra.mxu0 0
    %1343 = vmatprep.subr.bf16.mxu0 0
    %1344 = vmatpush1.bf16.msra.mxu0 0
    %1345 = vmatprep.subr.bf16.mxu0 0
    %1346 = vmatpush1.bf16.msra.mxu0 0
    %1347 = vmatprep.subr.bf16.mxu0 0
    %1348 = vmatpush1.bf16.msra.mxu0 0
    %1349 = vmatprep.mubr.bf16.mxu0 0
    %1350 = vmatmul.mubr.bf16.gmra.mrb[0].mxu0 %v1315
    %v1351 = vpop.f32.mrb[0].mxu0
    %v1352 = vadd.f32 %v1288, %v1351
    %v1353 = vpop.f32.mrb[0].mxu0
    %v1354 = vpop.f32.mrb[0].mxu0
    %v1355 = vadd.f32 %v1288, %v1354
    %v1356 = vpop.f32.mrb[0].mxu0
    %1357 = vdwg.mxu0
    %v1358 = vadd.f32 %v1203, %v1352
    %v1359 = vadd.f32 %v1204, %v1355
    %v1360 = vld [vmem:[%s7 + $0x4] sm:$0x1]
    %v1361 = vld [vmem:[%s7 + $0x5] sm:$0x1]
    %v1362 = vsel %vm115, %v1358, 0.0
    %1363 = vadd.xlane.f32.xlu0 %v1362
    %v1364 = vpop.xlane.xlu0 %1363
    %v1365 = vsel %vm115, %v1359, 0.0
    %1366 = vadd.xlane.f32.xlu0 %v1365
    %v1367 = vpop.xlane.xlu0 %1366
    %v1368 = vmul.f32 %v1364, %v1172
    %v1369 = vmul.f32 %v1367, %v1172
    %v1370 = vsub.f32 %v1358, %v1368
    %v1371 = vsub.f32 %v1359, %v1369
    %v1372 = vmul.f32 %v1370, %v1370
    %v1373 = vmul.f32 %v1371, %v1371
    %v1374 = vsel %vm115, %v1372, 0.0
    %1375 = vadd.xlane.f32.xlu0 %v1374
    %v1376 = vpop.xlane.xlu0 %1375
    %v1377 = vsel %vm115, %v1373, 0.0
    %1378 = vadd.xlane.f32.xlu0 %v1377
    %v1379 = vpop.xlane.xlu0 %1378
    %v1380 = vmul.f32 %v1376, %v1172
    %v1381 = vmul.f32 %v1379, %v1172
    %v1382 = vadd.f32 %v1380, 1e-05
    %v1383 = vadd.f32 %v1381, 1e-05
    %v1384 = vrsqrt.pop %v1382
    %v1385 = vrsqrt.pop %v1383
    %v1386 = vmul.f32 %v1370, %v1384
    %v1387 = vmul.f32 %v1371, %v1385
    %v1388 = vlaneseq
    %v1389 = vshrl.u32 %v1388, 7
    %v1390 = vsub.s32 0, %v1389
    %v1391 = vrot.slane %v1360, %v1390
    %v1392 = vmul.f32 %v1386, %v1391
    %v1393 = vmul.f32 %v1387, %v1391
    %v1394 = vlaneseq
    %v1395 = vshrl.u32 %v1394, 7
    %v1396 = vsub.s32 0, %v1395
    %v1397 = vrot.slane %v1361, %v1396
    %v1398 = vadd.f32 %v1392, %v1397
    %v1399 = vadd.f32 %v1393, %v1397
    %1402 = vrot.lane.b32.xlu0 %v665, 8
    %v1403 = vpop.permute.xlu0 %1402
    %1404 = vrot.lane.b32.xlu0 %v666, 8
    %v1405 = vpop.permute.xlu0 %1404
    %1410 = vrot.lane.b32.xlu0 %v667, 16
    %v1411 = vpop.permute.xlu0 %1410
    %1412 = vrot.lane.b32.xlu0 %v668, 16
    %v1413 = vpop.permute.xlu0 %1412
    %1418 = vrot.lane.b32.xlu0 %v669, 24
    %v1419 = vpop.permute.xlu0 %1418
    %1420 = vrot.lane.b32.xlu0 %v670, 24
    %v1421 = vpop.permute.xlu0 %1420
    %v1424 = vsel %vm188, %v663, %v1403
    %v1425 = vsel %vm188, %v664, %v1405
    %v1426 = vsel %vm1090, %v1424, %v1411
    %v1427 = vsel %vm1090, %v1425, %v1413
    %v1428 = vsel %vm1093, %v1426, %v1419
    %v1429 = vsel %vm1093, %v1427, %v1421
    %1432 = vrot.lane.b32.xlu0 %v1428, 32
    %v1433 = vpop.permute.xlu0 %1432
    %1434 = vrot.lane.b32.xlu0 %v1429, 32
    %v1435 = vpop.permute.xlu0 %1434
    %v1438 = vsel %vm115, %v1398, %v1433
    %v1439 = vsel %vm115, %v1399, %v1435
    %1440 = vst.msk [vmem:[#allocation10] sm:$0xff] %vm1313, %v1438
    %1441 = vst.msk [vmem:[#allocation10 + $0x8] sm:$0xff] %vm1313, %v1439
    // Predicated region
    $region54: #{tpu_custom_call.1} parent=1 // pred_check
      _
    $region55: #{tpu_custom_call.1} parent=1 // pred_check_branch
      %1443 = sbr.rel (0) target = $region57
    $region56: #{tpu_custom_call.1} parent=1 // pred_region
      %s1445 = ssub.s32 256, 256
      %1446 = vsyncadd [#allocation4], %s1445
      %s1447 = sshll.u32 [#allocation10], 4
      %s1448 = int_to_ptr.vmem [resolvable:$true] %s1447
      %1453 = dma.vmem_to_hbm [thread:$0]  %s1448, 256, %s9, [#allocation4], 128, 128, 8
    $region57: #{tpu_custom_call.1} parent=1 // pred_fallthru
      _
    // Predicated region
    $region58: #{tpu_custom_call.1} parent=1 // pred_check
      _
    $region59: #{tpu_custom_call.1} parent=1 // pred_check_branch
      %1455 = sbr.rel (0) target = $region61
    $region60: #{tpu_custom_call.1} parent=1 // pred_region
      %1456 = dma.done [#allocation4], 256
    $region61: #{tpu_custom_call.1} parent=1 // pred_fallthru
      _
    %1457 = vsyncpa [#allocation3], 1
    %1458 = vsyncpa [#allocation6], 1
    %1459 = vsyncpa [#allocation9], 1
    %1460 = vsyncpa [#allocation4], 1

</llo_original>
